<compile_context>
chip_gen: v7x
topology: tpu7x:2x2x1
jax: 0.10.0
libtpu: 0.0.40
codegen_flags: <defaults>
</compile_context>

<pallas_src>
import jax
import jax.numpy as jnp
from jax.experimental import pallas as pl
from jax.experimental.pallas import tpu as pltpu

SEQ_LEN = 30          # fixed in nn_arch.py
EMBED_LEN = 32        # embed_mat second dim
VOCAB_NUM = 50
N_FILT = 64
HIDDEN = 200

T_WIN = SEQ_LEN + 2   # 32 output-time positions kept per tile (t = 0..31; tail masked)
VPAD = 128            # per-tap vocab group padded to one lane tile
K_ALL = 3 * VPAD      # 384: stacked one-hot width (3 conv taps / time shifts)
N_OUT = 256           # lane-dense feature/output width: [c1|c2|c3|pad] = 4 * 64


def cnn_encode_kernel(ids_ref, wb_ref, bcat_ref, wl_ref, bl_ref, o_ref):
    """Fused CnnEncode forward for one batch tile.

    ids_ref : (3, TB, T) int32 -- token id at padded position t+g for tap g (-1 = zero pad)
    wb_ref  : (3*VPAD, N_OUT)  -- block weights embed@{w1, w2_*, w3_*}; 64-wide capsule cols
    bcat_ref: (1, N_OUT) f32   -- [b1 | b2 | b3 | 0]
    wl_ref  : (N_OUT, N_OUT)   -- final linear, zero-padded from (192, 200)
    bl_ref  : (1, N_OUT) f32
    o_ref   : (TB, N_OUT) f32
    """
    _, TB, T = ids_ref.shape
    L = T - 2                      # = SEQ_LEN
    F = N_FILT
    cdt = wb_ref.dtype             # MXU operand dtype (bf16 prod, f32 for checks)

    # Stacked one-hot: sh[b, t, g*128 + v] = (id[b, t+g] == v).  Sentinel -1 gives an
    # all-zero row -> conv zero padding for free.  Groups are 128-lane aligned so the
    # concat is tile-aligned (no lane shuffles).
    v_iota = jax.lax.broadcasted_iota(jnp.int32, (1, 1, VPAD), 2)
    ohs = [(ids_ref[g][:, :, None] == v_iota).astype(cdt) for g in range(3)]
    sh = jnp.concatenate(ohs, axis=-1)                                    # (TB, T, 384)

    # One MXU pass does the embedding gather AND all conv-tap accumulation:
    # y[..., 0:64] = c1, [64:128] = c2, [128:192] = c3 (pre-bias), [192:256] = 0.
    y = jnp.dot(sh.reshape(TB * T, 3 * VPAD), wb_ref[...],
                preferred_element_type=jnp.float32).reshape(TB, T, N_OUT)

    # Mask invalid output times (c1/c3 valid for t < L, c2 for t < L+1), max over time.
    # Bias add and ReLU commute with the max, so they run once on (TB, N_OUT).
    t_idx = jax.lax.broadcasted_iota(jnp.int32, (1, T, 1), 1)
    lane = jax.lax.broadcasted_iota(jnp.int32, (1, 1, N_OUT), 2)
    is_c2 = jnp.logical_and(lane >= F, lane < 2 * F)
    t_lim = jnp.where(is_c2, L + 1, L)
    ymax = jnp.max(jnp.where(t_idx < t_lim, y, jnp.float32(-1e30)), axis=1)   # (TB, N_OUT)

    feat = jnp.maximum(ymax + bcat_ref[...], 0.0).astype(cdt)                 # (TB, N_OUT)

    out = jnp.dot(feat, wl_ref[...], preferred_element_type=jnp.float32) + bl_ref[...]
    o_ref[...] = jnp.maximum(out, 0.0)                                        # (TB, N_OUT)


def cnn_encode(x_ids, params, *, matmul_dtype=jnp.bfloat16, tb=None):
    """x_ids: (B, SEQ_LEN) int token ids. Returns (B, HIDDEN) float32."""
    B, L = x_ids.shape
    assert L == SEQ_LEN
    V, E = params["embed"].shape
    F = N_FILT
    T = T_WIN

    # ---- one-time weight plumbing: fold embedding into tap weights (f32, cast once) ----
    emb = params["embed"].astype(jnp.float32)
    taps = {                                   # (shift g, capsule) -> embed @ w_tap  (V, F)
        (0, 1): emb @ params["w2"][0].astype(jnp.float32),
        (0, 2): emb @ params["w3"][0].astype(jnp.float32),
        (1, 0): emb @ params["w1"].astype(jnp.float32),
        (1, 1): emb @ params["w2"][1].astype(jnp.float32),
        (1, 2): emb @ params["w3"][1].astype(jnp.float32),
        (2, 2): emb @ params["w3"][2].astype(jnp.float32),
    }
    wb = jnp.zeros((K_ALL, N_OUT), jnp.float32)
    for (g, cap), w in taps.items():
        wb = wb.at[g * VPAD:g * VPAD + V, cap * F:(cap + 1) * F].set(w)
    wb = wb.astype(matmul_dtype)

    bcat = jnp.zeros((1, N_OUT), jnp.float32)
    bcat = bcat.at[:, 0:F].set(params["b1"].reshape(1, F))
    bcat = bcat.at[:, F:2 * F].set(params["b2"].reshape(1, F))
    bcat = bcat.at[:, 2 * F:3 * F].set(params["b3"].reshape(1, F))

    wl_pad = jnp.zeros((N_OUT, N_OUT), matmul_dtype)
    wl_pad = wl_pad.at[:3 * F, :HIDDEN].set(params["wl"].astype(matmul_dtype))
    bl_pad = jnp.zeros((1, N_OUT), jnp.float32).at[:, :HIDDEN].set(
        params["bl"].reshape(1, HIDDEN))

    # ---- batch tiling: tb multiple of 8, cap 128 (v7x VMEM), >=2 grid steps if possible ----
    def rup(a, m):
        return (a + m - 1) // m * m
    if tb is None:
        b8 = rup(B, 8)
        tb = b8 if b8 <= 8 else min(128, rup((b8 + 1) // 2, 8))
    B_pad = rup(B, tb)

    # ---- ids padded to T+2 with sentinel -1; pre-shifted into the 3 tap planes so the ----
    # ---- kernel never needs sublane-unaligned time slices                             ----
    ids_pad = jnp.full((B_pad, T + 2), -1, jnp.int32)
    ids_pad = ids_pad.at[:B, 1:SEQ_LEN + 1].set(x_ids.astype(jnp.int32))
    ids_sh = jnp.stack([ids_pad[:, 0:T], ids_pad[:, 1:T + 1], ids_pad[:, 2:T + 2]], axis=0)

    grid = (B_pad // tb,)
    out = pl.pallas_call(
        cnn_encode_kernel,
        out_shape=jax.ShapeDtypeStruct((B_pad, N_OUT), jnp.float32),
        grid_spec=pltpu.PrefetchScalarGridSpec(
            num_scalar_prefetch=0,
            grid=grid,
            in_specs=[
                pl.BlockSpec((3, tb, T), lambda b: (0, b, 0)),        # shifted token ids
                pl.BlockSpec((K_ALL, N_OUT), lambda b: (0, 0)),       # fused block weights
                pl.BlockSpec((1, N_OUT), lambda b: (0, 0)),           # [b1|b2|b3]
                pl.BlockSpec((N_OUT, N_OUT), lambda b: (0, 0)),       # wl (padded)
                pl.BlockSpec((1, N_OUT), lambda b: (0, 0)),           # bl (padded)
            ],
            out_specs=pl.BlockSpec((tb, N_OUT), lambda b: (b, 0)),
        ),
        compiler_params=pltpu.CompilerParams(
            dimension_semantics=("parallel",),
            vmem_limit_bytes=(32 if tb <= 128 else 96) * 1024 * 1024,
        ),
    )(ids_sh, wb, bcat, wl_pad, bl_pad)

    return out[:B, :HIDDEN]


def init_params(key):
    ks = jax.random.split(key, 9)
    s = 0.1
    return {
        "embed": jax.random.normal(ks[0], (VOCAB_NUM, EMBED_LEN), jnp.float32),
        "w1": jax.random.normal(ks[1], (EMBED_LEN, N_FILT), jnp.float32) * s,
        "b1": jax.random.normal(ks[2], (1, N_FILT), jnp.float32) * s,
        "w2": jax.random.normal(ks[3], (2, EMBED_LEN, N_FILT), jnp.float32) * s,
        "b2": jax.random.normal(ks[4], (1, N_FILT), jnp.float32) * s,
        "w3": jax.random.normal(ks[5], (3, EMBED_LEN, N_FILT), jnp.float32) * s,
        "b3": jax.random.normal(ks[6], (1, N_FILT), jnp.float32) * s,
        "wl": jax.random.normal(ks[7], (3 * N_FILT, HIDDEN), jnp.float32) * s,
        "bl": jax.random.normal(ks[8], (1, HIDDEN), jnp.float32) * s,
    }


def reference(x_ids, p):
    """Pure-JAX f32 reference mirroring the PyTorch forward."""
    emb = p["embed"][x_ids]                                             # (B, L, E)
    xp = jnp.pad(emb, ((0, 0), (1, 1), (0, 0)))
    L = SEQ_LEN

    def mm(x3, w):
        return jnp.einsum("ble,ec->blc", x3, w)

    c1 = mm(xp[:, 1:L + 1], p["w1"]) + p["b1"][None]
    f1 = jnp.max(jax.nn.relu(c1), axis=1)
    c2 = mm(xp[:, 0:L + 1], p["w2"][0]) + mm(xp[:, 1:L + 2], p["w2"][1]) + p["b2"][None]
    f2 = jnp.max(jax.nn.relu(c2), axis=1)
    c3 = (mm(xp[:, 0:L], p["w3"][0]) + mm(xp[:, 1:L + 1], p["w3"][1])
          + mm(xp[:, 2:L + 2], p["w3"][2]) + p["b3"][None])
    f3 = jnp.max(jax.nn.relu(c3), axis=1)
    feat = jnp.concatenate([f1, f2, f3], axis=-1)
    return jax.nn.relu(feat @ p["wl"] + p["bl"])


if __name__ == "__main__":
    key = jax.random.PRNGKey(0)
    kp, kx = jax.random.split(key)
    params = init_params(kp)

    B = 2
    x_ids = jax.random.randint(kx, (B, SEQ_LEN), 0, VOCAB_NUM, dtype=jnp.int32)

    ref = jax.block_until_ready(reference(x_ids, params))

    # Structural check: f32 MXU operands, tight tolerance.
    out_f32 = jax.block_until_ready(cnn_encode(x_ids, params, matmul_dtype=jnp.float32))
    assert out_f32.shape == (B, HIDDEN)
    assert jnp.allclose(out_f32, ref, atol=1e-4, rtol=1e-4)

    # Production path: bf16 MXU operands (f32 accumulate), bf16-level tolerance.
    out_bf16 = jax.block_until_ready(cnn_encode(x_ids, params, matmul_dtype=jnp.bfloat16))
    assert out_bf16.shape == (B, HIDDEN)
    assert jnp.allclose(out_bf16, ref, atol=1e-1, rtol=1e-1)

    print("KERNEL_OK")
</pallas_src>

<mosaic_0001>
module attributes {stable_mosaic.version = 11 : i64} {
  func.func @cnn_encode_kernel(%arg0: i32, %arg1: memref<3x8x32xi32, #tpu.memory_space<vmem>>, %arg2: memref<384x256xf32, #tpu.memory_space<vmem>>, %arg3: memref<1x256xf32, #tpu.memory_space<vmem>>, %arg4: memref<256x256xf32, #tpu.memory_space<vmem>>, %arg5: memref<1x256xf32, #tpu.memory_space<vmem>>, %arg6: memref<8x256xf32, #tpu.memory_space<vmem>>) attributes {dimension_semantics = [#tpu.dimension_semantics<parallel>], iteration_bounds = array<i64: 1>, scalar_prefetch = 0 : i64, scratch_operands = 0 : i64, tpu.core_type = #tpu.core_type<tc>, window_params = [{transform_indices = @transform_0, window_bounds = array<i64: 3, 8, 32>}, {pipeline_mode = #tpu.pipeline_mode<synchronous>, transform_indices = @transform_1, window_bounds = array<i64: 384, 256>}, {pipeline_mode = #tpu.pipeline_mode<synchronous>, transform_indices = @transform_2, window_bounds = array<i64: 1, 256>}, {pipeline_mode = #tpu.pipeline_mode<synchronous>, transform_indices = @transform_3, window_bounds = array<i64: 256, 256>}, {pipeline_mode = #tpu.pipeline_mode<synchronous>, transform_indices = @transform_4, window_bounds = array<i64: 1, 256>}, {transform_indices = @transform_5, window_bounds = array<i64: 8, 256>}]} {
    %0 = tpu.iota {dimensions = array<i32: 2>} : vector<1x1x128xi32>
    %c0 = arith.constant 0 : index
    %c0_0 = arith.constant 0 : index
    %c0_1 = arith.constant 0 : index
    %1 = vector.load %arg1[%c0, %c0_0, %c0_1] : memref<3x8x32xi32, #tpu.memory_space<vmem>>, vector<1x8x32xi32>
    %2 = vector.shape_cast %1 : vector<1x8x32xi32> to vector<8x32xi32>
    %3 = vector.shape_cast %2 : vector<8x32xi32> to vector<8x32x1xi32>
    %4 = vector.broadcast %3 : vector<8x32x1xi32> to vector<8x32x128xi32>
    %5 = vector.broadcast %0 : vector<1x1x128xi32> to vector<8x32x128xi32>
    %6 = arith.cmpi eq, %4, %5 : vector<8x32x128xi32>
    %7 = arith.extui %6 : vector<8x32x128xi1> to vector<8x32x128xi32>
    %8 = arith.sitofp %7 : vector<8x32x128xi32> to vector<8x32x128xf32>
    %c1 = arith.constant 1 : index
    %c0_2 = arith.constant 0 : index
    %c0_3 = arith.constant 0 : index
    %9 = vector.load %arg1[%c1, %c0_2, %c0_3] : memref<3x8x32xi32, #tpu.memory_space<vmem>>, vector<1x8x32xi32>
    %10 = vector.shape_cast %9 : vector<1x8x32xi32> to vector<8x32xi32>
    %11 = vector.shape_cast %10 : vector<8x32xi32> to vector<8x32x1xi32>
    %12 = vector.broadcast %11 : vector<8x32x1xi32> to vector<8x32x128xi32>
    %13 = vector.broadcast %0 : vector<1x1x128xi32> to vector<8x32x128xi32>
    %14 = arith.cmpi eq, %12, %13 : vector<8x32x128xi32>
    %15 = arith.extui %14 : vector<8x32x128xi1> to vector<8x32x128xi32>
    %16 = arith.sitofp %15 : vector<8x32x128xi32> to vector<8x32x128xf32>
    %c2 = arith.constant 2 : index
    %c0_4 = arith.constant 0 : index
    %c0_5 = arith.constant 0 : index
    %17 = vector.load %arg1[%c2, %c0_4, %c0_5] : memref<3x8x32xi32, #tpu.memory_space<vmem>>, vector<1x8x32xi32>
    %18 = vector.shape_cast %17 : vector<1x8x32xi32> to vector<8x32xi32>
    %19 = vector.shape_cast %18 : vector<8x32xi32> to vector<8x32x1xi32>
    %20 = vector.broadcast %19 : vector<8x32x1xi32> to vector<8x32x128xi32>
    %21 = vector.broadcast %0 : vector<1x1x128xi32> to vector<8x32x128xi32>
    %22 = arith.cmpi eq, %20, %21 : vector<8x32x128xi32>
    %23 = arith.extui %22 : vector<8x32x128xi1> to vector<8x32x128xi32>
    %24 = arith.sitofp %23 : vector<8x32x128xi32> to vector<8x32x128xf32>
    %25 = tpu.concatenate %8, %16, %24 in 2 : vector<8x32x128xf32>, vector<8x32x128xf32>, vector<8x32x128xf32> -> vector<8x32x384xf32>
    %26 = vector.shape_cast %25 : vector<8x32x384xf32> to vector<256x384xf32>
    %c0_6 = arith.constant 0 : index
    %c0_7 = arith.constant 0 : index
    %27 = vector.load %arg2[%c0_6, %c0_7] : memref<384x256xf32, #tpu.memory_space<vmem>>, vector<384x256xf32>
    %cst = arith.constant dense<0.000000e+00> : vector<256x256xf32>
    %28 = tpu.matmul %26, %27, %cst {dimension_numbers = #tpu.dot_dimension_numbers<[1], [0], [0], [1], [0, 0, 1, 1], [], []>} : vector<256x384xf32>, vector<384x256xf32>, vector<256x256xf32> -> vector<256x256xf32>
    %29 = vector.shape_cast %28 : vector<256x256xf32> to vector<8x32x256xf32>
    %30 = tpu.iota {dimensions = array<i32: 1>} : vector<1x32x1xi32>
    %31 = tpu.iota {dimensions = array<i32: 2>} : vector<1x1x256xi32>
    %c64_i32 = arith.constant 64 : i32
    %32 = vector.broadcast %c64_i32 : i32 to vector<1x1x256xi32>
    %33 = arith.cmpi sge, %31, %32 : vector<1x1x256xi32>
    %c128_i32 = arith.constant 128 : i32
    %34 = vector.broadcast %c128_i32 : i32 to vector<1x1x256xi32>
    %35 = arith.cmpi slt, %31, %34 : vector<1x1x256xi32>
    %36 = arith.andi %33, %35 : vector<1x1x256xi1>
    %c31_i32 = arith.constant 31 : i32
    %c30_i32 = arith.constant 30 : i32
    %37 = vector.broadcast %c31_i32 : i32 to vector<1x1x256xi32>
    %38 = vector.broadcast %c30_i32 : i32 to vector<1x1x256xi32>
    %39 = arith.select %36, %37, %38 : vector<1x1x256xi1>, vector<1x1x256xi32>
    %40 = vector.broadcast %30 : vector<1x32x1xi32> to vector<1x32x256xi32>
    %41 = vector.broadcast %39 : vector<1x1x256xi32> to vector<1x32x256xi32>
    %42 = arith.cmpi slt, %40, %41 : vector<1x32x256xi32>
    %cst_8 = arith.constant -1.000000e+30 : f32
    %43 = vector.shape_cast %42 : vector<1x32x256xi1> to vector<1x32x256xi1>
    %44 = vector.broadcast %43 : vector<1x32x256xi1> to vector<8x32x256xi1>
    %45 = vector.broadcast %cst_8 : f32 to vector<8x32x256xf32>
    %46 = arith.select %44, %29, %45 : vector<8x32x256xi1>, vector<8x32x256xf32>
    %cst_9 = arith.constant dense<0xFF800000> : vector<8x256xf32>
    %47 = vector.multi_reduction <maximumf>, %46, %cst_9 [1] : vector<8x32x256xf32> to vector<8x256xf32>
    %c0_10 = arith.constant 0 : index
    %c0_11 = arith.constant 0 : index
    %48 = vector.load %arg3[%c0_10, %c0_11] : memref<1x256xf32, #tpu.memory_space<vmem>>, vector<1x256xf32>
    %49 = vector.broadcast %48 : vector<1x256xf32> to vector<8x256xf32>
    %50 = arith.addf %47, %49 : vector<8x256xf32>
    %cst_12 = arith.constant 0.000000e+00 : f32
    %51 = vector.broadcast %cst_12 : f32 to vector<8x256xf32>
    %52 = arith.maximumf %50, %51 : vector<8x256xf32>
    %c0_13 = arith.constant 0 : index
    %c0_14 = arith.constant 0 : index
    %53 = vector.load %arg4[%c0_13, %c0_14] : memref<256x256xf32, #tpu.memory_space<vmem>>, vector<256x256xf32>
    %cst_15 = arith.constant dense<0.000000e+00> : vector<8x256xf32>
    %54 = tpu.matmul %52, %53, %cst_15 {dimension_numbers = #tpu.dot_dimension_numbers<[1], [0], [0], [1], [0, 0, 1, 1], [], []>} : vector<8x256xf32>, vector<256x256xf32>, vector<8x256xf32> -> vector<8x256xf32>
    %c0_16 = arith.constant 0 : index
    %c0_17 = arith.constant 0 : index
    %55 = vector.load %arg5[%c0_16, %c0_17] : memref<1x256xf32, #tpu.memory_space<vmem>>, vector<1x256xf32>
    %56 = vector.broadcast %55 : vector<1x256xf32> to vector<8x256xf32>
    %57 = arith.addf %54, %56 : vector<8x256xf32>
    %cst_18 = arith.constant 0.000000e+00 : f32
    %58 = vector.broadcast %cst_18 : f32 to vector<8x256xf32>
    %59 = arith.maximumf %57, %58 : vector<8x256xf32>
    %c0_19 = arith.constant 0 : index
    %c0_20 = arith.constant 0 : index
    %60 = vector.load %arg6[%c0_19, %c0_20] : memref<8x256xf32, #tpu.memory_space<vmem>>, vector<8x256xf32>
    tpu.vector_store %arg6[%c0_19, %c0_20], %59 {strides = array<i32>} : memref<8x256xf32, #tpu.memory_space<vmem>>, vector<8x256xf32>,
    return
  }
  func.func @transform_0(%arg0: i32) -> (i32, i32, i32) {
    %c0_i32 = arith.constant 0 : i32
    %c0_i32_0 = arith.constant 0 : i32
    %c0_i32_1 = arith.constant 0 : i32
    return %c0_i32, %arg0, %c0_i32_0 : i32, i32, i32
  }
  func.func @transform_1(%arg0: i32) -> (i32, i32) {
    %c0_i32 = arith.constant 0 : i32
    %c0_i32_0 = arith.constant 0 : i32
    %c0_i32_1 = arith.constant 0 : i32
    return %c0_i32, %c0_i32_0 : i32, i32
  }
  func.func @transform_2(%arg0: i32) -> (i32, i32) {
    %c0_i32 = arith.constant 0 : i32
    %c0_i32_0 = arith.constant 0 : i32
    %c0_i32_1 = arith.constant 0 : i32
    return %c0_i32, %c0_i32_0 : i32, i32
  }
  func.func @transform_3(%arg0: i32) -> (i32, i32) {
    %c0_i32 = arith.constant 0 : i32
    %c0_i32_0 = arith.constant 0 : i32
    %c0_i32_1 = arith.constant 0 : i32
    return %c0_i32, %c0_i32_0 : i32, i32
  }
  func.func @transform_4(%arg0: i32) -> (i32, i32) {
    %c0_i32 = arith.constant 0 : i32
    %c0_i32_0 = arith.constant 0 : i32
    %c0_i32_1 = arith.constant 0 : i32
    return %c0_i32, %c0_i32_0 : i32, i32
  }
  func.func @transform_5(%arg0: i32) -> (i32, i32) {
    %c0_i32 = arith.constant 0 : i32
    %c0_i32_0 = arith.constant 0 : i32
    return %arg0, %c0_i32 : i32, i32
  }
}

</mosaic_0001>

<llo_original>
// kernel: tpu_custom_call.1
$region0: #{tpu_custom_call.1}
  #allocation0 [shape = 'u32[]', space=smem, size = 0x4, offset = 0x4, fixed_abs, tag = 'smem constant byte address 0x4 - core index']
  #allocation1 [shape = 'u32[144,128]{1,0:T(1,128)}', space=vmem, size = 0x12000, scoped, tag = 'internal scratch']
  %s0 = inlined_call_operand.hbm [shape: s32[3,8,32], index: 0, kind: input, shape index: {}]
  %s1 = inlined_call_operand.hbm [shape: f32[384,256], index: 1, kind: input, shape index: {}]
  %s2 = inlined_call_operand.vmem [shape: f32[1,256], index: 2, kind: input, shape index: {}]
  %s3 = inlined_call_operand.hbm [shape: f32[256,256], index: 3, kind: input, shape index: {}]
  %s4 = inlined_call_operand.vmem [shape: f32[1,256], index: 4, kind: input, shape index: {}]
  %s5 = inlined_call_operand.hbm [shape: f32[8,256], index: 5, kind: output, shape index: {}]
  %s6 = sld [smem:[#allocation0]]
  $region42: #{tpu_custom_call.1} parent=0
    _
  %s8 = ssub.s32 1, %s6
  %s9 = scalar_select 0, %s8, %s6
  $region1: #{tpu_custom_call.1} parent=0
    #allocation2 [shape = 'u8[12288]{0}', space=vmem, size = 0x3000, scoped, tag = 'input window, operand 0, single buffered']
    #allocation3 [shape = 's32[1]{0}', space=sflag, size = 0x4, scoped, tag = 'scoped memory for tpu_custom_call.1']
    #allocation4 [shape = 's32[1]{0}', space=sflag, size = 0x4, scoped, tag = 'scoped memory for tpu_custom_call.1']
    #allocation5 [shape = 'u8[393216]{0}', space=vmem, size = 0x60000, scoped, tag = 'input window, operand 1, single buffered']
    #allocation6 [shape = 's32[1]{0}', space=sflag, size = 0x4, scoped, tag = 'scoped memory for tpu_custom_call.1']
    #allocation7 [shape = 'u8[262144]{0}', space=vmem, size = 0x40000, scoped, tag = 'input window, operand 3, single buffered']
    #allocation8 [shape = 'u8[8192]{0}', space=vmem, size = 0x2000, scoped, tag = 'output window, operand 0, single buffered']
    %10 = vsyncpa [#allocation3], 0
    %11 = vsyncpa [#allocation6], 0
    %12 = vsyncpa [#allocation4], 0
    // Predicated region
    $region2: #{tpu_custom_call.1} parent=1 // pred_check
      _
    $region3: #{tpu_custom_call.1} parent=1 // pred_check_branch
      %14 = sbr.rel (0) target = $region5
    $region4: #{tpu_custom_call.1} parent=1 // pred_region
      %s16 = ssub.s32 384, 384
      %17 = vsyncadd [#allocation3], %s16
      %s18 = sshll.u32 [#allocation2], 4
      %s19 = int_to_ptr.vmem [resolvable:$true] %s18
      %24 = dma.hbm_to_vmem [thread:$0]  %s0, 384, %s19, [#allocation3], 128, 128, 8
    $region5: #{tpu_custom_call.1} parent=1 // pred_fallthru
      _
    // Predicated region
    $region6: #{tpu_custom_call.1} parent=1 // pred_check
      _
    $region7: #{tpu_custom_call.1} parent=1 // pred_check_branch
      %26 = sbr.rel (0) target = $region9
    $region8: #{tpu_custom_call.1} parent=1 // pred_region
      %s28 = ssub.s32 12288, 12288
      %29 = vsyncadd [#allocation6], %s28
      %s30 = sshll.u32 [#allocation5], 4
      %s31 = int_to_ptr.vmem [resolvable:$true] %s30
      %36 = dma.hbm_to_vmem [thread:$0]  %s1, 12288, %s31, [#allocation6], 256, 256, 16
    $region9: #{tpu_custom_call.1} parent=1 // pred_fallthru
      _
    // Predicated region
    $region10: #{tpu_custom_call.1} parent=1 // pred_check
      _
    $region11: #{tpu_custom_call.1} parent=1 // pred_check_branch
      %38 = sbr.rel (0) target = $region13
    $region12: #{tpu_custom_call.1} parent=1 // pred_region
      _
    $region13: #{tpu_custom_call.1} parent=1 // pred_fallthru
      _
    // Predicated region
    $region14: #{tpu_custom_call.1} parent=1 // pred_check
      _
    $region15: #{tpu_custom_call.1} parent=1 // pred_check_branch
      %40 = sbr.rel (0) target = $region17
    $region16: #{tpu_custom_call.1} parent=1 // pred_region
      %s42 = ssub.s32 8192, 8192
      %43 = vsyncadd [#allocation6], %s42
      %s44 = sshll.u32 [#allocation7], 4
      %s45 = int_to_ptr.vmem [resolvable:$true] %s44
      %50 = dma.hbm_to_vmem [thread:$0]  %s3, 8192, %s45, [#allocation6], 256, 256, 16
    $region17: #{tpu_custom_call.1} parent=1 // pred_fallthru
      _
    // Predicated region
    $region18: #{tpu_custom_call.1} parent=1 // pred_check
      _
    $region19: #{tpu_custom_call.1} parent=1 // pred_check_branch
      %52 = sbr.rel (0) target = $region21
    $region20: #{tpu_custom_call.1} parent=1 // pred_region
      _
    $region21: #{tpu_custom_call.1} parent=1 // pred_fallthru
      _
    // Predicated region
    $region22: #{tpu_custom_call.1} parent=1 // pred_check
      _
    $region23: #{tpu_custom_call.1} parent=1 // pred_check_branch
      %54 = sbr.rel (0) target = $region25
    $region24: #{tpu_custom_call.1} parent=1 // pred_region
      %55 = dma.done [#allocation3], 384
    $region25: #{tpu_custom_call.1} parent=1 // pred_fallthru
      _
    // Predicated region
    $region26: #{tpu_custom_call.1} parent=1 // pred_check
      _
    $region27: #{tpu_custom_call.1} parent=1 // pred_check_branch
      %57 = sbr.rel (0) target = $region29
    $region28: #{tpu_custom_call.1} parent=1 // pred_region
      %58 = dma.done [#allocation6], 12288
    $region29: #{tpu_custom_call.1} parent=1 // pred_fallthru
      _
    // Predicated region
    $region30: #{tpu_custom_call.1} parent=1 // pred_check
      _
    $region31: #{tpu_custom_call.1} parent=1 // pred_check_branch
      %60 = sbr.rel (0) target = $region33
    $region32: #{tpu_custom_call.1} parent=1 // pred_region
      %61 = dma.done [#allocation6], 8192
    $region33: #{tpu_custom_call.1} parent=1 // pred_fallthru
      _
    %v62 = vlaneseq
    %v63 = vand.u32 %v62, 127
    %v64 = vld [vmem:[#allocation2] sm:$0xff]
    %v65 = vlaneseq
    %v66 = vshrl.u32 %v65, 7
    %v67 = vsub.s32 0, %v66
    %v68 = vrot.slane %v64, %v67
    %70 = vbcast.lane.b32.xlu0 %v68, 256
    %v71 = vpop.permute.xlu0 %70
    %s73 = sor.u32 256, 8
    %74 = vbcast.lane.b32.xlu0 %v68, %s73
    %v75 = vpop.permute.xlu0 %74
    %s77 = sor.u32 256, 16
    %78 = vbcast.lane.b32.xlu0 %v68, %s77
    %v79 = vpop.permute.xlu0 %78
    %s81 = sor.u32 256, 24
    %82 = vbcast.lane.b32.xlu0 %v68, %s81
    %v83 = vpop.permute.xlu0 %82
    %v84 = vlaneseq
    %v85 = vshrl.u32 %v84, 7
    %v86 = vsub.s32 1, %v85
    %v87 = vrot.slane %v64, %v86
    %89 = vbcast.lane.b32.xlu0 %v87, 256
    %v90 = vpop.permute.xlu0 %89
    %s92 = sor.u32 256, 8
    %93 = vbcast.lane.b32.xlu0 %v87, %s92
    %v94 = vpop.permute.xlu0 %93
    %s96 = sor.u32 256, 16
    %97 = vbcast.lane.b32.xlu0 %v87, %s96
    %v98 = vpop.permute.xlu0 %97
    %s100 = sor.u32 256, 24
    %101 = vbcast.lane.b32.xlu0 %v87, %s100
    %v102 = vpop.permute.xlu0 %101
    %v103 = vlaneseq
    %v104 = vshrl.u32 %v103, 7
    %v105 = vsub.s32 2, %v104
    %v106 = vrot.slane %v64, %v105
    %108 = vbcast.lane.b32.xlu0 %v106, 256
    %v109 = vpop.permute.xlu0 %108
    %s111 = sor.u32 256, 8
    %112 = vbcast.lane.b32.xlu0 %v106, %s111
    %v113 = vpop.permute.xlu0 %112
    %s115 = sor.u32 256, 16
    %116 = vbcast.lane.b32.xlu0 %v106, %s115
    %v117 = vpop.permute.xlu0 %116
    %s119 = sor.u32 256, 24
    %120 = vbcast.lane.b32.xlu0 %v106, %s119
    %v121 = vpop.permute.xlu0 %120
    %v122 = vlaneseq
    %v123 = vshrl.u32 %v122, 7
    %v124 = vsub.s32 3, %v123
    %v125 = vrot.slane %v64, %v124
    %127 = vbcast.lane.b32.xlu0 %v125, 256
    %v128 = vpop.permute.xlu0 %127
    %s130 = sor.u32 256, 8
    %131 = vbcast.lane.b32.xlu0 %v125, %s130
    %v132 = vpop.permute.xlu0 %131
    %s134 = sor.u32 256, 16
    %135 = vbcast.lane.b32.xlu0 %v125, %s134
    %v136 = vpop.permute.xlu0 %135
    %s138 = sor.u32 256, 24
    %139 = vbcast.lane.b32.xlu0 %v125, %s138
    %v140 = vpop.permute.xlu0 %139
    %v141 = vlaneseq
    %v142 = vshrl.u32 %v141, 7
    %v143 = vsub.s32 4, %v142
    %v144 = vrot.slane %v64, %v143
    %146 = vbcast.lane.b32.xlu0 %v144, 256
    %v147 = vpop.permute.xlu0 %146
    %s149 = sor.u32 256, 8
    %150 = vbcast.lane.b32.xlu0 %v144, %s149
    %v151 = vpop.permute.xlu0 %150
    %s153 = sor.u32 256, 16
    %154 = vbcast.lane.b32.xlu0 %v144, %s153
    %v155 = vpop.permute.xlu0 %154
    %s157 = sor.u32 256, 24
    %158 = vbcast.lane.b32.xlu0 %v144, %s157
    %v159 = vpop.permute.xlu0 %158
    %v160 = vlaneseq
    %v161 = vshrl.u32 %v160, 7
    %v162 = vsub.s32 5, %v161
    %v163 = vrot.slane %v64, %v162
    %165 = vbcast.lane.b32.xlu0 %v163, 256
    %v166 = vpop.permute.xlu0 %165
    %s168 = sor.u32 256, 8
    %169 = vbcast.lane.b32.xlu0 %v163, %s168
    %v170 = vpop.permute.xlu0 %169
    %s172 = sor.u32 256, 16
    %173 = vbcast.lane.b32.xlu0 %v163, %s172
    %v174 = vpop.permute.xlu0 %173
    %s176 = sor.u32 256, 24
    %177 = vbcast.lane.b32.xlu0 %v163, %s176
    %v178 = vpop.permute.xlu0 %177
    %v179 = vlaneseq
    %v180 = vshrl.u32 %v179, 7
    %v181 = vsub.s32 6, %v180
    %v182 = vrot.slane %v64, %v181
    %184 = vbcast.lane.b32.xlu0 %v182, 256
    %v185 = vpop.permute.xlu0 %184
    %s187 = sor.u32 256, 8
    %188 = vbcast.lane.b32.xlu0 %v182, %s187
    %v189 = vpop.permute.xlu0 %188
    %s191 = sor.u32 256, 16
    %192 = vbcast.lane.b32.xlu0 %v182, %s191
    %v193 = vpop.permute.xlu0 %192
    %s195 = sor.u32 256, 24
    %196 = vbcast.lane.b32.xlu0 %v182, %s195
    %v197 = vpop.permute.xlu0 %196
    %v198 = vlaneseq
    %v199 = vshrl.u32 %v198, 7
    %v200 = vsub.s32 7, %v199
    %v201 = vrot.slane %v64, %v200
    %203 = vbcast.lane.b32.xlu0 %v201, 256
    %v204 = vpop.permute.xlu0 %203
    %s206 = sor.u32 256, 8
    %207 = vbcast.lane.b32.xlu0 %v201, %s206
    %v208 = vpop.permute.xlu0 %207
    %s210 = sor.u32 256, 16
    %211 = vbcast.lane.b32.xlu0 %v201, %s210
    %v212 = vpop.permute.xlu0 %211
    %s214 = sor.u32 256, 24
    %215 = vbcast.lane.b32.xlu0 %v201, %s214
    %v216 = vpop.permute.xlu0 %215
    %vm217 = vcmp.eq.s32.totalorder %v71, %v63
    %vm218 = vcmp.eq.s32.totalorder %v75, %v63
    %vm219 = vcmp.eq.s32.totalorder %v79, %v63
    %vm220 = vcmp.eq.s32.totalorder %v83, %v63
    %vm221 = vcmp.eq.s32.totalorder %v90, %v63
    %vm222 = vcmp.eq.s32.totalorder %v94, %v63
    %vm223 = vcmp.eq.s32.totalorder %v98, %v63
    %vm224 = vcmp.eq.s32.totalorder %v102, %v63
    %vm225 = vcmp.eq.s32.totalorder %v109, %v63
    %vm226 = vcmp.eq.s32.totalorder %v113, %v63
    %vm227 = vcmp.eq.s32.totalorder %v117, %v63
    %vm228 = vcmp.eq.s32.totalorder %v121, %v63
    %vm229 = vcmp.eq.s32.totalorder %v128, %v63
    %vm230 = vcmp.eq.s32.totalorder %v132, %v63
    %vm231 = vcmp.eq.s32.totalorder %v136, %v63
    %vm232 = vcmp.eq.s32.totalorder %v140, %v63
    %vm233 = vcmp.eq.s32.totalorder %v147, %v63
    %vm234 = vcmp.eq.s32.totalorder %v151, %v63
    %vm235 = vcmp.eq.s32.totalorder %v155, %v63
    %vm236 = vcmp.eq.s32.totalorder %v159, %v63
    %vm237 = vcmp.eq.s32.totalorder %v166, %v63
    %vm238 = vcmp.eq.s32.totalorder %v170, %v63
    %vm239 = vcmp.eq.s32.totalorder %v174, %v63
    %vm240 = vcmp.eq.s32.totalorder %v178, %v63
    %vm241 = vcmp.eq.s32.totalorder %v185, %v63
    %vm242 = vcmp.eq.s32.totalorder %v189, %v63
    %vm243 = vcmp.eq.s32.totalorder %v193, %v63
    %vm244 = vcmp.eq.s32.totalorder %v197, %v63
    %vm245 = vcmp.eq.s32.totalorder %v204, %v63
    %vm246 = vcmp.eq.s32.totalorder %v208, %v63
    %vm247 = vcmp.eq.s32.totalorder %v212, %v63
    %vm248 = vcmp.eq.s32.totalorder %v216, %v63
    %v249 = vsel %vm217, 1, 0
    %v250 = vsel %vm218, 1, 0
    %v251 = vsel %vm219, 1, 0
    %v252 = vsel %vm220, 1, 0
    %v253 = vsel %vm221, 1, 0
    %v254 = vsel %vm222, 1, 0
    %v255 = vsel %vm223, 1, 0
    %v256 = vsel %vm224, 1, 0
    %v257 = vsel %vm225, 1, 0
    %v258 = vsel %vm226, 1, 0
    %v259 = vsel %vm227, 1, 0
    %v260 = vsel %vm228, 1, 0
    %v261 = vsel %vm229, 1, 0
    %v262 = vsel %vm230, 1, 0
    %v263 = vsel %vm231, 1, 0
    %v264 = vsel %vm232, 1, 0
    %v265 = vsel %vm233, 1, 0
    %v266 = vsel %vm234, 1, 0
    %v267 = vsel %vm235, 1, 0
    %v268 = vsel %vm236, 1, 0
    %v269 = vsel %vm237, 1, 0
    %v270 = vsel %vm238, 1, 0
    %v271 = vsel %vm239, 1, 0
    %v272 = vsel %vm240, 1, 0
    %v273 = vsel %vm241, 1, 0
    %v274 = vsel %vm242, 1, 0
    %v275 = vsel %vm243, 1, 0
    %v276 = vsel %vm244, 1, 0
    %v277 = vsel %vm245, 1, 0
    %v278 = vsel %vm246, 1, 0
    %v279 = vsel %vm247, 1, 0
    %v280 = vsel %vm248, 1, 0
    %v281 = vcvt.s32.f32 %v249
    %v282 = vcvt.s32.f32 %v250
    %v283 = vcvt.s32.f32 %v251
    %v284 = vcvt.s32.f32 %v252
    %v285 = vcvt.s32.f32 %v253
    %v286 = vcvt.s32.f32 %v254
    %v287 = vcvt.s32.f32 %v255
    %v288 = vcvt.s32.f32 %v256
    %v289 = vcvt.s32.f32 %v257
    %v290 = vcvt.s32.f32 %v258
    %v291 = vcvt.s32.f32 %v259
    %v292 = vcvt.s32.f32 %v260
    %v293 = vcvt.s32.f32 %v261
    %v294 = vcvt.s32.f32 %v262
    %v295 = vcvt.s32.f32 %v263
    %v296 = vcvt.s32.f32 %v264
    %v297 = vcvt.s32.f32 %v265
    %v298 = vcvt.s32.f32 %v266
    %v299 = vcvt.s32.f32 %v267
    %v300 = vcvt.s32.f32 %v268
    %v301 = vcvt.s32.f32 %v269
    %v302 = vcvt.s32.f32 %v270
    %v303 = vcvt.s32.f32 %v271
    %v304 = vcvt.s32.f32 %v272
    %v305 = vcvt.s32.f32 %v273
    %v306 = vcvt.s32.f32 %v274
    %v307 = vcvt.s32.f32 %v275
    %v308 = vcvt.s32.f32 %v276
    %v309 = vcvt.s32.f32 %v277
    %v310 = vcvt.s32.f32 %v278
    %v311 = vcvt.s32.f32 %v279
    %v312 = vcvt.s32.f32 %v280
    %s313 = scalar_lea.vmem [#allocation2], 8
    %v314 = vld [vmem:[%s313] sm:$0xff]
    %v315 = vlaneseq
    %v316 = vshrl.u32 %v315, 7
    %v317 = vsub.s32 0, %v316
    %v318 = vrot.slane %v314, %v317
    %320 = vbcast.lane.b32.xlu0 %v318, 256
    %v321 = vpop.permute.xlu0 %320
    %s323 = sor.u32 256, 8
    %324 = vbcast.lane.b32.xlu0 %v318, %s323
    %v325 = vpop.permute.xlu0 %324
    %s327 = sor.u32 256, 16
    %328 = vbcast.lane.b32.xlu0 %v318, %s327
    %v329 = vpop.permute.xlu0 %328
    %s331 = sor.u32 256, 24
    %332 = vbcast.lane.b32.xlu0 %v318, %s331
    %v333 = vpop.permute.xlu0 %332
    %v334 = vlaneseq
    %v335 = vshrl.u32 %v334, 7
    %v336 = vsub.s32 1, %v335
    %v337 = vrot.slane %v314, %v336
    %339 = vbcast.lane.b32.xlu0 %v337, 256
    %v340 = vpop.permute.xlu0 %339
    %s342 = sor.u32 256, 8
    %343 = vbcast.lane.b32.xlu0 %v337, %s342
    %v344 = vpop.permute.xlu0 %343
    %s346 = sor.u32 256, 16
    %347 = vbcast.lane.b32.xlu0 %v337, %s346
    %v348 = vpop.permute.xlu0 %347
    %s350 = sor.u32 256, 24
    %351 = vbcast.lane.b32.xlu0 %v337, %s350
    %v352 = vpop.permute.xlu0 %351
    %v353 = vlaneseq
    %v354 = vshrl.u32 %v353, 7
    %v355 = vsub.s32 2, %v354
    %v356 = vrot.slane %v314, %v355
    %358 = vbcast.lane.b32.xlu0 %v356, 256
    %v359 = vpop.permute.xlu0 %358
    %s361 = sor.u32 256, 8
    %362 = vbcast.lane.b32.xlu0 %v356, %s361
    %v363 = vpop.permute.xlu0 %362
    %s365 = sor.u32 256, 16
    %366 = vbcast.lane.b32.xlu0 %v356, %s365
    %v367 = vpop.permute.xlu0 %366
    %s369 = sor.u32 256, 24
    %370 = vbcast.lane.b32.xlu0 %v356, %s369
    %v371 = vpop.permute.xlu0 %370
    %v372 = vlaneseq
    %v373 = vshrl.u32 %v372, 7
    %v374 = vsub.s32 3, %v373
    %v375 = vrot.slane %v314, %v374
    %377 = vbcast.lane.b32.xlu0 %v375, 256
    %v378 = vpop.permute.xlu0 %377
    %s380 = sor.u32 256, 8
    %381 = vbcast.lane.b32.xlu0 %v375, %s380
    %v382 = vpop.permute.xlu0 %381
    %s384 = sor.u32 256, 16
    %385 = vbcast.lane.b32.xlu0 %v375, %s384
    %v386 = vpop.permute.xlu0 %385
    %s388 = sor.u32 256, 24
    %389 = vbcast.lane.b32.xlu0 %v375, %s388
    %v390 = vpop.permute.xlu0 %389
    %v391 = vlaneseq
    %v392 = vshrl.u32 %v391, 7
    %v393 = vsub.s32 4, %v392
    %v394 = vrot.slane %v314, %v393
    %396 = vbcast.lane.b32.xlu0 %v394, 256
    %v397 = vpop.permute.xlu0 %396
    %s399 = sor.u32 256, 8
    %400 = vbcast.lane.b32.xlu0 %v394, %s399
    %v401 = vpop.permute.xlu0 %400
    %s403 = sor.u32 256, 16
    %404 = vbcast.lane.b32.xlu0 %v394, %s403
    %v405 = vpop.permute.xlu0 %404
    %s407 = sor.u32 256, 24
    %408 = vbcast.lane.b32.xlu0 %v394, %s407
    %v409 = vpop.permute.xlu0 %408
    %v410 = vlaneseq
    %v411 = vshrl.u32 %v410, 7
    %v412 = vsub.s32 5, %v411
    %v413 = vrot.slane %v314, %v412
    %415 = vbcast.lane.b32.xlu0 %v413, 256
    %v416 = vpop.permute.xlu0 %415
    %s418 = sor.u32 256, 8
    %419 = vbcast.lane.b32.xlu0 %v413, %s418
    %v420 = vpop.permute.xlu0 %419
    %s422 = sor.u32 256, 16
    %423 = vbcast.lane.b32.xlu0 %v413, %s422
    %v424 = vpop.permute.xlu0 %423
    %s426 = sor.u32 256, 24
    %427 = vbcast.lane.b32.xlu0 %v413, %s426
    %v428 = vpop.permute.xlu0 %427
    %v429 = vlaneseq
    %v430 = vshrl.u32 %v429, 7
    %v431 = vsub.s32 6, %v430
    %v432 = vrot.slane %v314, %v431
    %434 = vbcast.lane.b32.xlu0 %v432, 256
    %v435 = vpop.permute.xlu0 %434
    %s437 = sor.u32 256, 8
    %438 = vbcast.lane.b32.xlu0 %v432, %s437
    %v439 = vpop.permute.xlu0 %438
    %s441 = sor.u32 256, 16
    %442 = vbcast.lane.b32.xlu0 %v432, %s441
    %v443 = vpop.permute.xlu0 %442
    %s445 = sor.u32 256, 24
    %446 = vbcast.lane.b32.xlu0 %v432, %s445
    %v447 = vpop.permute.xlu0 %446
    %v448 = vlaneseq
    %v449 = vshrl.u32 %v448, 7
    %v450 = vsub.s32 7, %v449
    %v451 = vrot.slane %v314, %v450
    %453 = vbcast.lane.b32.xlu0 %v451, 256
    %v454 = vpop.permute.xlu0 %453
    %s456 = sor.u32 256, 8
    %457 = vbcast.lane.b32.xlu0 %v451, %s456
    %v458 = vpop.permute.xlu0 %457
    %s460 = sor.u32 256, 16
    %461 = vbcast.lane.b32.xlu0 %v451, %s460
    %v462 = vpop.permute.xlu0 %461
    %s464 = sor.u32 256, 24
    %465 = vbcast.lane.b32.xlu0 %v451, %s464
    %v466 = vpop.permute.xlu0 %465
    %vm467 = vcmp.eq.s32.totalorder %v321, %v63
    %vm468 = vcmp.eq.s32.totalorder %v325, %v63
    %vm469 = vcmp.eq.s32.totalorder %v329, %v63
    %vm470 = vcmp.eq.s32.totalorder %v333, %v63
    %vm471 = vcmp.eq.s32.totalorder %v340, %v63
    %vm472 = vcmp.eq.s32.totalorder %v344, %v63
    %vm473 = vcmp.eq.s32.totalorder %v348, %v63
    %vm474 = vcmp.eq.s32.totalorder %v352, %v63
    %vm475 = vcmp.eq.s32.totalorder %v359, %v63
    %vm476 = vcmp.eq.s32.totalorder %v363, %v63
    %vm477 = vcmp.eq.s32.totalorder %v367, %v63
    %vm478 = vcmp.eq.s32.totalorder %v371, %v63
    %vm479 = vcmp.eq.s32.totalorder %v378, %v63
    %vm480 = vcmp.eq.s32.totalorder %v382, %v63
    %vm481 = vcmp.eq.s32.totalorder %v386, %v63
    %vm482 = vcmp.eq.s32.totalorder %v390, %v63
    %vm483 = vcmp.eq.s32.totalorder %v397, %v63
    %vm484 = vcmp.eq.s32.totalorder %v401, %v63
    %vm485 = vcmp.eq.s32.totalorder %v405, %v63
    %vm486 = vcmp.eq.s32.totalorder %v409, %v63
    %vm487 = vcmp.eq.s32.totalorder %v416, %v63
    %vm488 = vcmp.eq.s32.totalorder %v420, %v63
    %vm489 = vcmp.eq.s32.totalorder %v424, %v63
    %vm490 = vcmp.eq.s32.totalorder %v428, %v63
    %vm491 = vcmp.eq.s32.totalorder %v435, %v63
    %vm492 = vcmp.eq.s32.totalorder %v439, %v63
    %vm493 = vcmp.eq.s32.totalorder %v443, %v63
    %vm494 = vcmp.eq.s32.totalorder %v447, %v63
    %vm495 = vcmp.eq.s32.totalorder %v454, %v63
    %vm496 = vcmp.eq.s32.totalorder %v458, %v63
    %vm497 = vcmp.eq.s32.totalorder %v462, %v63
    %vm498 = vcmp.eq.s32.totalorder %v466, %v63
    %v499 = vsel %vm467, 1, 0
    %v500 = vsel %vm468, 1, 0
    %v501 = vsel %vm469, 1, 0
    %v502 = vsel %vm470, 1, 0
    %v503 = vsel %vm471, 1, 0
    %v504 = vsel %vm472, 1, 0
    %v505 = vsel %vm473, 1, 0
    %v506 = vsel %vm474, 1, 0
    %v507 = vsel %vm475, 1, 0
    %v508 = vsel %vm476, 1, 0
    %v509 = vsel %vm477, 1, 0
    %v510 = vsel %vm478, 1, 0
    %v511 = vsel %vm479, 1, 0
    %v512 = vsel %vm480, 1, 0
    %v513 = vsel %vm481, 1, 0
    %v514 = vsel %vm482, 1, 0
    %v515 = vsel %vm483, 1, 0
    %v516 = vsel %vm484, 1, 0
    %v517 = vsel %vm485, 1, 0
    %v518 = vsel %vm486, 1, 0
    %v519 = vsel %vm487, 1, 0
    %v520 = vsel %vm488, 1, 0
    %v521 = vsel %vm489, 1, 0
    %v522 = vsel %vm490, 1, 0
    %v523 = vsel %vm491, 1, 0
    %v524 = vsel %vm492, 1, 0
    %v525 = vsel %vm493, 1, 0
    %v526 = vsel %vm494, 1, 0
    %v527 = vsel %vm495, 1, 0
    %v528 = vsel %vm496, 1, 0
    %v529 = vsel %vm497, 1, 0
    %v530 = vsel %vm498, 1, 0
    %v531 = vcvt.s32.f32 %v499
    %v532 = vcvt.s32.f32 %v500
    %v533 = vcvt.s32.f32 %v501
    %v534 = vcvt.s32.f32 %v502
    %v535 = vcvt.s32.f32 %v503
    %v536 = vcvt.s32.f32 %v504
    %v537 = vcvt.s32.f32 %v505
    %v538 = vcvt.s32.f32 %v506
    %v539 = vcvt.s32.f32 %v507
    %v540 = vcvt.s32.f32 %v508
    %v541 = vcvt.s32.f32 %v509
    %v542 = vcvt.s32.f32 %v510
    %v543 = vcvt.s32.f32 %v511
    %v544 = vcvt.s32.f32 %v512
    %v545 = vcvt.s32.f32 %v513
    %v546 = vcvt.s32.f32 %v514
    %v547 = vcvt.s32.f32 %v515
    %v548 = vcvt.s32.f32 %v516
    %v549 = vcvt.s32.f32 %v517
    %v550 = vcvt.s32.f32 %v518
    %v551 = vcvt.s32.f32 %v519
    %v552 = vcvt.s32.f32 %v520
    %v553 = vcvt.s32.f32 %v521
    %v554 = vcvt.s32.f32 %v522
    %v555 = vcvt.s32.f32 %v523
    %v556 = vcvt.s32.f32 %v524
    %v557 = vcvt.s32.f32 %v525
    %v558 = vcvt.s32.f32 %v526
    %v559 = vcvt.s32.f32 %v527
    %v560 = vcvt.s32.f32 %v528
    %v561 = vcvt.s32.f32 %v529
    %v562 = vcvt.s32.f32 %v530
    %s563 = scalar_lea.vmem [#allocation2], 16
    %v564 = vld [vmem:[%s563] sm:$0xff]
    %v565 = vlaneseq
    %v566 = vshrl.u32 %v565, 7
    %v567 = vsub.s32 0, %v566
    %v568 = vrot.slane %v564, %v567
    %570 = vbcast.lane.b32.xlu0 %v568, 256
    %v571 = vpop.permute.xlu0 %570
    %s573 = sor.u32 256, 8
    %574 = vbcast.lane.b32.xlu0 %v568, %s573
    %v575 = vpop.permute.xlu0 %574
    %s577 = sor.u32 256, 16
    %578 = vbcast.lane.b32.xlu0 %v568, %s577
    %v579 = vpop.permute.xlu0 %578
    %s581 = sor.u32 256, 24
    %582 = vbcast.lane.b32.xlu0 %v568, %s581
    %v583 = vpop.permute.xlu0 %582
    %v584 = vlaneseq
    %v585 = vshrl.u32 %v584, 7
    %v586 = vsub.s32 1, %v585
    %v587 = vrot.slane %v564, %v586
    %589 = vbcast.lane.b32.xlu0 %v587, 256
    %v590 = vpop.permute.xlu0 %589
    %s592 = sor.u32 256, 8
    %593 = vbcast.lane.b32.xlu0 %v587, %s592
    %v594 = vpop.permute.xlu0 %593
    %s596 = sor.u32 256, 16
    %597 = vbcast.lane.b32.xlu0 %v587, %s596
    %v598 = vpop.permute.xlu0 %597
    %s600 = sor.u32 256, 24
    %601 = vbcast.lane.b32.xlu0 %v587, %s600
    %v602 = vpop.permute.xlu0 %601
    %v603 = vlaneseq
    %v604 = vshrl.u32 %v603, 7
    %v605 = vsub.s32 2, %v604
    %v606 = vrot.slane %v564, %v605
    %608 = vbcast.lane.b32.xlu0 %v606, 256
    %v609 = vpop.permute.xlu0 %608
    %s611 = sor.u32 256, 8
    %612 = vbcast.lane.b32.xlu0 %v606, %s611
    %v613 = vpop.permute.xlu0 %612
    %s615 = sor.u32 256, 16
    %616 = vbcast.lane.b32.xlu0 %v606, %s615
    %v617 = vpop.permute.xlu0 %616
    %s619 = sor.u32 256, 24
    %620 = vbcast.lane.b32.xlu0 %v606, %s619
    %v621 = vpop.permute.xlu0 %620
    %v622 = vlaneseq
    %v623 = vshrl.u32 %v622, 7
    %v624 = vsub.s32 3, %v623
    %v625 = vrot.slane %v564, %v624
    %627 = vbcast.lane.b32.xlu0 %v625, 256
    %v628 = vpop.permute.xlu0 %627
    %s630 = sor.u32 256, 8
    %631 = vbcast.lane.b32.xlu0 %v625, %s630
    %v632 = vpop.permute.xlu0 %631
    %s634 = sor.u32 256, 16
    %635 = vbcast.lane.b32.xlu0 %v625, %s634
    %v636 = vpop.permute.xlu0 %635
    %s638 = sor.u32 256, 24
    %639 = vbcast.lane.b32.xlu0 %v625, %s638
    %v640 = vpop.permute.xlu0 %639
    %v641 = vlaneseq
    %v642 = vshrl.u32 %v641, 7
    %v643 = vsub.s32 4, %v642
    %v644 = vrot.slane %v564, %v643
    %646 = vbcast.lane.b32.xlu0 %v644, 256
    %v647 = vpop.permute.xlu0 %646
    %s649 = sor.u32 256, 8
    %650 = vbcast.lane.b32.xlu0 %v644, %s649
    %v651 = vpop.permute.xlu0 %650
    %s653 = sor.u32 256, 16
    %654 = vbcast.lane.b32.xlu0 %v644, %s653
    %v655 = vpop.permute.xlu0 %654
    %s657 = sor.u32 256, 24
    %658 = vbcast.lane.b32.xlu0 %v644, %s657
    %v659 = vpop.permute.xlu0 %658
    %v660 = vlaneseq
    %v661 = vshrl.u32 %v660, 7
    %v662 = vsub.s32 5, %v661
    %v663 = vrot.slane %v564, %v662
    %665 = vbcast.lane.b32.xlu0 %v663, 256
    %v666 = vpop.permute.xlu0 %665
    %s668 = sor.u32 256, 8
    %669 = vbcast.lane.b32.xlu0 %v663, %s668
    %v670 = vpop.permute.xlu0 %669
    %s672 = sor.u32 256, 16
    %673 = vbcast.lane.b32.xlu0 %v663, %s672
    %v674 = vpop.permute.xlu0 %673
    %s676 = sor.u32 256, 24
    %677 = vbcast.lane.b32.xlu0 %v663, %s676
    %v678 = vpop.permute.xlu0 %677
    %v679 = vlaneseq
    %v680 = vshrl.u32 %v679, 7
    %v681 = vsub.s32 6, %v680
    %v682 = vrot.slane %v564, %v681
    %684 = vbcast.lane.b32.xlu0 %v682, 256
    %v685 = vpop.permute.xlu0 %684
    %s687 = sor.u32 256, 8
    %688 = vbcast.lane.b32.xlu0 %v682, %s687
    %v689 = vpop.permute.xlu0 %688
    %s691 = sor.u32 256, 16
    %692 = vbcast.lane.b32.xlu0 %v682, %s691
    %v693 = vpop.permute.xlu0 %692
    %s695 = sor.u32 256, 24
    %696 = vbcast.lane.b32.xlu0 %v682, %s695
    %v697 = vpop.permute.xlu0 %696
    %v698 = vlaneseq
    %v699 = vshrl.u32 %v698, 7
    %v700 = vsub.s32 7, %v699
    %v701 = vrot.slane %v564, %v700
    %703 = vbcast.lane.b32.xlu0 %v701, 256
    %v704 = vpop.permute.xlu0 %703
    %s706 = sor.u32 256, 8
    %707 = vbcast.lane.b32.xlu0 %v701, %s706
    %v708 = vpop.permute.xlu0 %707
    %s710 = sor.u32 256, 16
    %711 = vbcast.lane.b32.xlu0 %v701, %s710
    %v712 = vpop.permute.xlu0 %711
    %s714 = sor.u32 256, 24
    %715 = vbcast.lane.b32.xlu0 %v701, %s714
    %v716 = vpop.permute.xlu0 %715
    %vm717 = vcmp.eq.s32.totalorder %v571, %v63
    %vm718 = vcmp.eq.s32.totalorder %v575, %v63
    %vm719 = vcmp.eq.s32.totalorder %v579, %v63
    %vm720 = vcmp.eq.s32.totalorder %v583, %v63
    %vm721 = vcmp.eq.s32.totalorder %v590, %v63
    %vm722 = vcmp.eq.s32.totalorder %v594, %v63
    %vm723 = vcmp.eq.s32.totalorder %v598, %v63
    %vm724 = vcmp.eq.s32.totalorder %v602, %v63
    %vm725 = vcmp.eq.s32.totalorder %v609, %v63
    %vm726 = vcmp.eq.s32.totalorder %v613, %v63
    %vm727 = vcmp.eq.s32.totalorder %v617, %v63
    %vm728 = vcmp.eq.s32.totalorder %v621, %v63
    %vm729 = vcmp.eq.s32.totalorder %v628, %v63
    %vm730 = vcmp.eq.s32.totalorder %v632, %v63
    %vm731 = vcmp.eq.s32.totalorder %v636, %v63
    %vm732 = vcmp.eq.s32.totalorder %v640, %v63
    %vm733 = vcmp.eq.s32.totalorder %v647, %v63
    %vm734 = vcmp.eq.s32.totalorder %v651, %v63
    %vm735 = vcmp.eq.s32.totalorder %v655, %v63
    %vm736 = vcmp.eq.s32.totalorder %v659, %v63
    %vm737 = vcmp.eq.s32.totalorder %v666, %v63
    %vm738 = vcmp.eq.s32.totalorder %v670, %v63
    %vm739 = vcmp.eq.s32.totalorder %v674, %v63
    %vm740 = vcmp.eq.s32.totalorder %v678, %v63
    %vm741 = vcmp.eq.s32.totalorder %v685, %v63
    %vm742 = vcmp.eq.s32.totalorder %v689, %v63
    %vm743 = vcmp.eq.s32.totalorder %v693, %v63
    %vm744 = vcmp.eq.s32.totalorder %v697, %v63
    %vm745 = vcmp.eq.s32.totalorder %v704, %v63
    %vm746 = vcmp.eq.s32.totalorder %v708, %v63
    %vm747 = vcmp.eq.s32.totalorder %v712, %v63
    %vm748 = vcmp.eq.s32.totalorder %v716, %v63
    %v749 = vsel %vm717, 1, 0
    %v750 = vsel %vm718, 1, 0
    %v751 = vsel %vm719, 1, 0
    %v752 = vsel %vm720, 1, 0
    %v753 = vsel %vm721, 1, 0
    %v754 = vsel %vm722, 1, 0
    %v755 = vsel %vm723, 1, 0
    %v756 = vsel %vm724, 1, 0
    %v757 = vsel %vm725, 1, 0
    %v758 = vsel %vm726, 1, 0
    %v759 = vsel %vm727, 1, 0
    %v760 = vsel %vm728, 1, 0
    %v761 = vsel %vm729, 1, 0
    %v762 = vsel %vm730, 1, 0
    %v763 = vsel %vm731, 1, 0
    %v764 = vsel %vm732, 1, 0
    %v765 = vsel %vm733, 1, 0
    %v766 = vsel %vm734, 1, 0
    %v767 = vsel %vm735, 1, 0
    %v768 = vsel %vm736, 1, 0
    %v769 = vsel %vm737, 1, 0
    %v770 = vsel %vm738, 1, 0
    %v771 = vsel %vm739, 1, 0
    %v772 = vsel %vm740, 1, 0
    %v773 = vsel %vm741, 1, 0
    %v774 = vsel %vm742, 1, 0
    %v775 = vsel %vm743, 1, 0
    %v776 = vsel %vm744, 1, 0
    %v777 = vsel %vm745, 1, 0
    %v778 = vsel %vm746, 1, 0
    %v779 = vsel %vm747, 1, 0
    %v780 = vsel %vm748, 1, 0
    %v781 = vcvt.s32.f32 %v749
    %v782 = vcvt.s32.f32 %v750
    %v783 = vcvt.s32.f32 %v751
    %v784 = vcvt.s32.f32 %v752
    %v785 = vcvt.s32.f32 %v753
    %v786 = vcvt.s32.f32 %v754
    %v787 = vcvt.s32.f32 %v755
    %v788 = vcvt.s32.f32 %v756
    %v789 = vcvt.s32.f32 %v757
    %v790 = vcvt.s32.f32 %v758
    %v791 = vcvt.s32.f32 %v759
    %v792 = vcvt.s32.f32 %v760
    %v793 = vcvt.s32.f32 %v761
    %v794 = vcvt.s32.f32 %v762
    %v795 = vcvt.s32.f32 %v763
    %v796 = vcvt.s32.f32 %v764
    %v797 = vcvt.s32.f32 %v765
    %v798 = vcvt.s32.f32 %v766
    %v799 = vcvt.s32.f32 %v767
    %v800 = vcvt.s32.f32 %v768
    %v801 = vcvt.s32.f32 %v769
    %v802 = vcvt.s32.f32 %v770
    %v803 = vcvt.s32.f32 %v771
    %v804 = vcvt.s32.f32 %v772
    %v805 = vcvt.s32.f32 %v773
    %v806 = vcvt.s32.f32 %v774
    %v807 = vcvt.s32.f32 %v775
    %v808 = vcvt.s32.f32 %v776
    %v809 = vcvt.s32.f32 %v777
    %v810 = vcvt.s32.f32 %v778
    %v811 = vcvt.s32.f32 %v779
    %v812 = vcvt.s32.f32 %v780
    %v813 = vld [vmem:[#allocation5] sm:$0xff]
    %v814 = vld [vmem:[#allocation5 + $0x8] sm:$0xff]
    %v815 = vld [vmem:[#allocation5 + $0x10] sm:$0xff]
    %v816 = vld [vmem:[#allocation5 + $0x18] sm:$0xff]
    %v817 = vld [vmem:[#allocation5 + $0x20] sm:$0xff]
    %v818 = vld [vmem:[#allocation5 + $0x28] sm:$0xff]
    %v819 = vld [vmem:[#allocation5 + $0x30] sm:$0xff]
    %v820 = vld [vmem:[#allocation5 + $0x38] sm:$0xff]
    %v821 = vld [vmem:[#allocation5 + $0x40] sm:$0xff]
    %v822 = vld [vmem:[#allocation5 + $0x48] sm:$0xff]
    %v823 = vld [vmem:[#allocation5 + $0x50] sm:$0xff]
    %v824 = vld [vmem:[#allocation5 + $0x58] sm:$0xff]
    %v825 = vld [vmem:[#allocation5 + $0x60] sm:$0xff]
    %v826 = vld [vmem:[#allocation5 + $0x68] sm:$0xff]
    %v827 = vld [vmem:[#allocation5 + $0x70] sm:$0xff]
    %v828 = vld [vmem:[#allocation5 + $0x78] sm:$0xff]
    %v829 = vld [vmem:[#allocation5 + $0x80] sm:$0xff]
    %v830 = vld [vmem:[#allocation5 + $0x88] sm:$0xff]
    %v831 = vld [vmem:[#allocation5 + $0x90] sm:$0xff]
    %v832 = vld [vmem:[#allocation5 + $0x98] sm:$0xff]
    %v833 = vld [vmem:[#allocation5 + $0xa0] sm:$0xff]
    %v834 = vld [vmem:[#allocation5 + $0xa8] sm:$0xff]
    %v835 = vld [vmem:[#allocation5 + $0xb0] sm:$0xff]
    %v836 = vld [vmem:[#allocation5 + $0xb8] sm:$0xff]
    %v837 = vld [vmem:[#allocation5 + $0xc0] sm:$0xff]
    %v838 = vld [vmem:[#allocation5 + $0xc8] sm:$0xff]
    %v839 = vld [vmem:[#allocation5 + $0xd0] sm:$0xff]
    %v840 = vld [vmem:[#allocation5 + $0xd8] sm:$0xff]
    %v841 = vld [vmem:[#allocation5 + $0xe0] sm:$0xff]
    %v842 = vld [vmem:[#allocation5 + $0xe8] sm:$0xff]
    %v843 = vld [vmem:[#allocation5 + $0xf0] sm:$0xff]
    %v844 = vld [vmem:[#allocation5 + $0xf8] sm:$0xff]
    %v845 = vld [vmem:[#allocation5 + $0x100] sm:$0xff]
    %v846 = vld [vmem:[#allocation5 + $0x108] sm:$0xff]
    %v847 = vld [vmem:[#allocation5 + $0x110] sm:$0xff]
    %v848 = vld [vmem:[#allocation5 + $0x118] sm:$0xff]
    %v849 = vld [vmem:[#allocation5 + $0x120] sm:$0xff]
    %v850 = vld [vmem:[#allocation5 + $0x128] sm:$0xff]
    %v851 = vld [vmem:[#allocation5 + $0x130] sm:$0xff]
    %v852 = vld [vmem:[#allocation5 + $0x138] sm:$0xff]
    %v853 = vld [vmem:[#allocation5 + $0x140] sm:$0xff]
    %v854 = vld [vmem:[#allocation5 + $0x148] sm:$0xff]
    %v855 = vld [vmem:[#allocation5 + $0x150] sm:$0xff]
    %v856 = vld [vmem:[#allocation5 + $0x158] sm:$0xff]
    %v857 = vld [vmem:[#allocation5 + $0x160] sm:$0xff]
    %v858 = vld [vmem:[#allocation5 + $0x168] sm:$0xff]
    %v859 = vld [vmem:[#allocation5 + $0x170] sm:$0xff]
    %v860 = vld [vmem:[#allocation5 + $0x178] sm:$0xff]
    %v861 = vld [vmem:[#allocation5 + $0x180] sm:$0xff]
    %v862 = vld [vmem:[#allocation5 + $0x188] sm:$0xff]
    %v863 = vld [vmem:[#allocation5 + $0x190] sm:$0xff]
    %v864 = vld [vmem:[#allocation5 + $0x198] sm:$0xff]
    %v865 = vld [vmem:[#allocation5 + $0x1a0] sm:$0xff]
    %v866 = vld [vmem:[#allocation5 + $0x1a8] sm:$0xff]
    %v867 = vld [vmem:[#allocation5 + $0x1b0] sm:$0xff]
    %v868 = vld [vmem:[#allocation5 + $0x1b8] sm:$0xff]
    %v869 = vld [vmem:[#allocation5 + $0x1c0] sm:$0xff]
    %v870 = vld [vmem:[#allocation5 + $0x1c8] sm:$0xff]
    %v871 = vld [vmem:[#allocation5 + $0x1d0] sm:$0xff]
    %v872 = vld [vmem:[#allocation5 + $0x1d8] sm:$0xff]
    %v873 = vld [vmem:[#allocation5 + $0x1e0] sm:$0xff]
    %v874 = vld [vmem:[#allocation5 + $0x1e8] sm:$0xff]
    %v875 = vld [vmem:[#allocation5 + $0x1f0] sm:$0xff]
    %v876 = vld [vmem:[#allocation5 + $0x1f8] sm:$0xff]
    %v877 = vld [vmem:[#allocation5 + $0x200] sm:$0xff]
    %v878 = vld [vmem:[#allocation5 + $0x208] sm:$0xff]
    %v879 = vld [vmem:[#allocation5 + $0x210] sm:$0xff]
    %v880 = vld [vmem:[#allocation5 + $0x218] sm:$0xff]
    %v881 = vld [vmem:[#allocation5 + $0x220] sm:$0xff]
    %v882 = vld [vmem:[#allocation5 + $0x228] sm:$0xff]
    %v883 = vld [vmem:[#allocation5 + $0x230] sm:$0xff]
    %v884 = vld [vmem:[#allocation5 + $0x238] sm:$0xff]
    %v885 = vld [vmem:[#allocation5 + $0x240] sm:$0xff]
    %v886 = vld [vmem:[#allocation5 + $0x248] sm:$0xff]
    %v887 = vld [vmem:[#allocation5 + $0x250] sm:$0xff]
    %v888 = vld [vmem:[#allocation5 + $0x258] sm:$0xff]
    %v889 = vld [vmem:[#allocation5 + $0x260] sm:$0xff]
    %v890 = vld [vmem:[#allocation5 + $0x268] sm:$0xff]
    %v891 = vld [vmem:[#allocation5 + $0x270] sm:$0xff]
    %v892 = vld [vmem:[#allocation5 + $0x278] sm:$0xff]
    %v893 = vld [vmem:[#allocation5 + $0x280] sm:$0xff]
    %v894 = vld [vmem:[#allocation5 + $0x288] sm:$0xff]
    %v895 = vld [vmem:[#allocation5 + $0x290] sm:$0xff]
    %v896 = vld [vmem:[#allocation5 + $0x298] sm:$0xff]
    %v897 = vld [vmem:[#allocation5 + $0x2a0] sm:$0xff]
    %v898 = vld [vmem:[#allocation5 + $0x2a8] sm:$0xff]
    %v899 = vld [vmem:[#allocation5 + $0x2b0] sm:$0xff]
    %v900 = vld [vmem:[#allocation5 + $0x2b8] sm:$0xff]
    %v901 = vld [vmem:[#allocation5 + $0x2c0] sm:$0xff]
    %v902 = vld [vmem:[#allocation5 + $0x2c8] sm:$0xff]
    %v903 = vld [vmem:[#allocation5 + $0x2d0] sm:$0xff]
    %v904 = vld [vmem:[#allocation5 + $0x2d8] sm:$0xff]
    %v905 = vld [vmem:[#allocation5 + $0x2e0] sm:$0xff]
    %v906 = vld [vmem:[#allocation5 + $0x2e8] sm:$0xff]
    %v907 = vld [vmem:[#allocation5 + $0x2f0] sm:$0xff]
    %v908 = vld [vmem:[#allocation5 + $0x2f8] sm:$0xff]
    %909 = vmatprep.subr.mxu0 %v814
    %910 = vmatpush1.msra.mxu0 %v813
    %911 = vmatprep.subr.mxu0 %v816
    %912 = vmatpush1.msra.mxu0 %v815
    %913 = vmatprep.subr.mxu0 %v818
    %914 = vmatpush1.msra.mxu0 %v817
    %915 = vmatprep.subr.mxu0 %v820
    %916 = vmatpush1.msra.mxu0 %v819
    %917 = vmatprep.subr.mxu0 %v822
    %918 = vmatpush1.msra.mxu0 %v821
    %919 = vmatprep.subr.mxu0 %v824
    %920 = vmatpush1.msra.mxu0 %v823
    %921 = vmatprep.subr.mxu0 %v826
    %922 = vmatpush1.msra.mxu0 %v825
    %923 = vmatprep.subr.mxu0 %v828
    %924 = vmatpush1.msra.mxu0 %v827
    %925 = vmatprep.subr.mxu0 %v830
    %926 = vmatpush1.msra.mxu0 %v829
    %927 = vmatprep.subr.mxu0 %v832
    %928 = vmatpush1.msra.mxu0 %v831
    %929 = vmatprep.subr.mxu0 %v834
    %930 = vmatpush1.msra.mxu0 %v833
    %931 = vmatprep.subr.mxu0 %v836
    %932 = vmatpush1.msra.mxu0 %v835
    %933 = vmatprep.subr.mxu0 %v838
    %934 = vmatpush1.msra.mxu0 %v837
    %935 = vmatprep.subr.mxu0 %v840
    %936 = vmatpush1.msra.mxu0 %v839
    %937 = vmatprep.subr.mxu0 %v842
    %938 = vmatpush1.msra.mxu0 %v841
    %939 = vmatprep.subr.mxu0 %v844
    %940 = vmatpush1.msra.mxu0 %v843
    %941 = vmatprep.subr.mxu0 %v846
    %942 = vmatpush1.msra.mxu0 %v845
    %943 = vmatprep.subr.mxu0 %v848
    %944 = vmatpush1.msra.mxu0 %v847
    %945 = vmatprep.subr.mxu0 %v850
    %946 = vmatpush1.msra.mxu0 %v849
    %947 = vmatprep.subr.mxu0 %v852
    %948 = vmatpush1.msra.mxu0 %v851
    %949 = vmatprep.subr.mxu0 %v854
    %950 = vmatpush1.msra.mxu0 %v853
    %951 = vmatprep.subr.mxu0 %v856
    %952 = vmatpush1.msra.mxu0 %v855
    %953 = vmatprep.subr.mxu0 %v858
    %954 = vmatpush1.msra.mxu0 %v857
    %955 = vmatprep.subr.mxu0 %v860
    %956 = vmatpush1.msra.mxu0 %v859
    %957 = vmatprep.subr.mxu0 %v862
    %958 = vmatpush1.msra.mxu0 %v861
    %959 = vmatprep.subr.mxu0 %v864
    %960 = vmatpush1.msra.mxu0 %v863
    %961 = vmatprep.subr.mxu0 %v866
    %962 = vmatpush1.msra.mxu0 %v865
    %963 = vmatprep.subr.mxu0 %v868
    %964 = vmatpush1.msra.mxu0 %v867
    %965 = vmatprep.subr.mxu0 %v870
    %966 = vmatpush1.msra.mxu0 %v869
    %967 = vmatprep.subr.mxu0 %v872
    %968 = vmatpush1.msra.mxu0 %v871
    %969 = vmatprep.subr.mxu0 %v874
    %970 = vmatpush1.msra.mxu0 %v873
    %971 = vmatprep.subr.mxu0 %v876
    %972 = vmatpush1.msra.mxu0 %v875
    %973 = vmatprep.mubr.f32.mxu0 %v531
    %974 = vmatmul.mubr.f32.gmra.mrb[0].mxu0 %v281
    %v975 = vpop.f32.mrb[0].mxu0
    %v976 = vadd.f32 0.0, %v975
    %v977 = vpop.f32.mrb[0].mxu0
    %v978 = vadd.f32 0.0, %v977
    %979 = vmatprep.mubr.f32.mxu0 %v532
    %980 = vmatmul.mubr.f32.gmra.mrb[0].mxu0 %v282
    %v981 = vpop.f32.mrb[0].mxu0
    %v982 = vadd.f32 0.0, %v981
    %v983 = vpop.f32.mrb[0].mxu0
    %v984 = vadd.f32 0.0, %v983
    %985 = vmatprep.mubr.f32.mxu0 %v533
    %986 = vmatmul.mubr.f32.gmra.mrb[0].mxu0 %v283
    %v987 = vpop.f32.mrb[0].mxu0
    %v988 = vadd.f32 0.0, %v987
    %v989 = vpop.f32.mrb[0].mxu0
    %v990 = vadd.f32 0.0, %v989
    %991 = vmatprep.mubr.f32.mxu0 %v534
    %992 = vmatmul.mubr.f32.gmra.mrb[0].mxu0 %v284
    %v993 = vpop.f32.mrb[0].mxu0
    %v994 = vadd.f32 0.0, %v993
    %v995 = vpop.f32.mrb[0].mxu0
    %v996 = vadd.f32 0.0, %v995
    %997 = vmatprep.mubr.f32.mxu0 %v535
    %998 = vmatmul.mubr.f32.gmra.mrb[0].mxu0 %v285
    %v999 = vpop.f32.mrb[0].mxu0
    %v1000 = vadd.f32 0.0, %v999
    %v1001 = vpop.f32.mrb[0].mxu0
    %v1002 = vadd.f32 0.0, %v1001
    %1003 = vmatprep.mubr.f32.mxu0 %v536
    %1004 = vmatmul.mubr.f32.gmra.mrb[0].mxu0 %v286
    %v1005 = vpop.f32.mrb[0].mxu0
    %v1006 = vadd.f32 0.0, %v1005
    %v1007 = vpop.f32.mrb[0].mxu0
    %v1008 = vadd.f32 0.0, %v1007
    %1009 = vmatprep.mubr.f32.mxu0 %v537
    %1010 = vmatmul.mubr.f32.gmra.mrb[0].mxu0 %v287
    %v1011 = vpop.f32.mrb[0].mxu0
    %v1012 = vadd.f32 0.0, %v1011
    %v1013 = vpop.f32.mrb[0].mxu0
    %v1014 = vadd.f32 0.0, %v1013
    %1015 = vmatprep.mubr.f32.mxu0 %v538
    %1016 = vmatmul.mubr.f32.gmra.mrb[0].mxu0 %v288
    %v1017 = vpop.f32.mrb[0].mxu0
    %v1018 = vadd.f32 0.0, %v1017
    %v1019 = vpop.f32.mrb[0].mxu0
    %v1020 = vadd.f32 0.0, %v1019
    %1021 = vmatprep.mubr.f32.mxu0 %v539
    %1022 = vmatmul.mubr.f32.gmra.mrb[0].mxu0 %v289
    %v1023 = vpop.f32.mrb[0].mxu0
    %v1024 = vadd.f32 0.0, %v1023
    %v1025 = vpop.f32.mrb[0].mxu0
    %v1026 = vadd.f32 0.0, %v1025
    %1027 = vmatprep.mubr.f32.mxu0 %v540
    %1028 = vmatmul.mubr.f32.gmra.mrb[0].mxu0 %v290
    %v1029 = vpop.f32.mrb[0].mxu0
    %v1030 = vadd.f32 0.0, %v1029
    %v1031 = vpop.f32.mrb[0].mxu0
    %v1032 = vadd.f32 0.0, %v1031
    %1033 = vmatprep.mubr.f32.mxu0 %v541
    %1034 = vmatmul.mubr.f32.gmra.mrb[0].mxu0 %v291
    %v1035 = vpop.f32.mrb[0].mxu0
    %v1036 = vadd.f32 0.0, %v1035
    %v1037 = vpop.f32.mrb[0].mxu0
    %v1038 = vadd.f32 0.0, %v1037
    %1039 = vmatprep.mubr.f32.mxu0 %v542
    %1040 = vmatmul.mubr.f32.gmra.mrb[0].mxu0 %v292
    %v1041 = vpop.f32.mrb[0].mxu0
    %v1042 = vadd.f32 0.0, %v1041
    %v1043 = vpop.f32.mrb[0].mxu0
    %v1044 = vadd.f32 0.0, %v1043
    %1045 = vmatprep.mubr.f32.mxu0 %v543
    %1046 = vmatmul.mubr.f32.gmra.mrb[0].mxu0 %v293
    %v1047 = vpop.f32.mrb[0].mxu0
    %v1048 = vadd.f32 0.0, %v1047
    %v1049 = vpop.f32.mrb[0].mxu0
    %v1050 = vadd.f32 0.0, %v1049
    %1051 = vmatprep.mubr.f32.mxu0 %v544
    %1052 = vmatmul.mubr.f32.gmra.mrb[0].mxu0 %v294
    %v1053 = vpop.f32.mrb[0].mxu0
    %v1054 = vadd.f32 0.0, %v1053
    %v1055 = vpop.f32.mrb[0].mxu0
    %v1056 = vadd.f32 0.0, %v1055
    %1057 = vmatprep.mubr.f32.mxu0 %v545
    %1058 = vmatmul.mubr.f32.gmra.mrb[0].mxu0 %v295
    %v1059 = vpop.f32.mrb[0].mxu0
    %v1060 = vadd.f32 0.0, %v1059
    %v1061 = vpop.f32.mrb[0].mxu0
    %v1062 = vadd.f32 0.0, %v1061
    %1063 = vmatprep.mubr.f32.mxu0 %v546
    %1064 = vmatmul.mubr.f32.gmra.mrb[0].mxu0 %v296
    %v1065 = vpop.f32.mrb[0].mxu0
    %v1066 = vadd.f32 0.0, %v1065
    %v1067 = vpop.f32.mrb[0].mxu0
    %v1068 = vadd.f32 0.0, %v1067
    %1069 = vmatprep.mubr.f32.mxu0 %v547
    %1070 = vmatmul.mubr.f32.gmra.mrb[0].mxu0 %v297
    %v1071 = vpop.f32.mrb[0].mxu0
    %v1072 = vadd.f32 0.0, %v1071
    %v1073 = vpop.f32.mrb[0].mxu0
    %v1074 = vadd.f32 0.0, %v1073
    %1075 = vmatprep.mubr.f32.mxu0 %v548
    %1076 = vmatmul.mubr.f32.gmra.mrb[0].mxu0 %v298
    %v1077 = vpop.f32.mrb[0].mxu0
    %v1078 = vadd.f32 0.0, %v1077
    %v1079 = vpop.f32.mrb[0].mxu0
    %v1080 = vadd.f32 0.0, %v1079
    %1081 = vmatprep.mubr.f32.mxu0 %v549
    %1082 = vmatmul.mubr.f32.gmra.mrb[0].mxu0 %v299
    %v1083 = vpop.f32.mrb[0].mxu0
    %v1084 = vadd.f32 0.0, %v1083
    %v1085 = vpop.f32.mrb[0].mxu0
    %v1086 = vadd.f32 0.0, %v1085
    %1087 = vmatprep.mubr.f32.mxu0 %v550
    %1088 = vmatmul.mubr.f32.gmra.mrb[0].mxu0 %v300
    %v1089 = vpop.f32.mrb[0].mxu0
    %v1090 = vadd.f32 0.0, %v1089
    %v1091 = vpop.f32.mrb[0].mxu0
    %v1092 = vadd.f32 0.0, %v1091
    %1093 = vmatprep.mubr.f32.mxu0 %v551
    %1094 = vmatmul.mubr.f32.gmra.mrb[0].mxu0 %v301
    %v1095 = vpop.f32.mrb[0].mxu0
    %v1096 = vadd.f32 0.0, %v1095
    %v1097 = vpop.f32.mrb[0].mxu0
    %v1098 = vadd.f32 0.0, %v1097
    %1099 = vmatprep.mubr.f32.mxu0 %v552
    %1100 = vmatmul.mubr.f32.gmra.mrb[0].mxu0 %v302
    %v1101 = vpop.f32.mrb[0].mxu0
    %v1102 = vadd.f32 0.0, %v1101
    %v1103 = vpop.f32.mrb[0].mxu0
    %v1104 = vadd.f32 0.0, %v1103
    %1105 = vmatprep.mubr.f32.mxu0 %v553
    %1106 = vmatmul.mubr.f32.gmra.mrb[0].mxu0 %v303
    %v1107 = vpop.f32.mrb[0].mxu0
    %v1108 = vadd.f32 0.0, %v1107
    %v1109 = vpop.f32.mrb[0].mxu0
    %v1110 = vadd.f32 0.0, %v1109
    %1111 = vmatprep.mubr.f32.mxu0 %v554
    %1112 = vmatmul.mubr.f32.gmra.mrb[0].mxu0 %v304
    %v1113 = vpop.f32.mrb[0].mxu0
    %v1114 = vadd.f32 0.0, %v1113
    %v1115 = vpop.f32.mrb[0].mxu0
    %v1116 = vadd.f32 0.0, %v1115
    %1117 = vmatprep.mubr.f32.mxu0 %v555
    %1118 = vmatmul.mubr.f32.gmra.mrb[0].mxu0 %v305
    %v1119 = vpop.f32.mrb[0].mxu0
    %v1120 = vadd.f32 0.0, %v1119
    %v1121 = vpop.f32.mrb[0].mxu0
    %v1122 = vadd.f32 0.0, %v1121
    %1123 = vmatprep.mubr.f32.mxu0 %v556
    %1124 = vmatmul.mubr.f32.gmra.mrb[0].mxu0 %v306
    %v1125 = vpop.f32.mrb[0].mxu0
    %v1126 = vadd.f32 0.0, %v1125
    %v1127 = vpop.f32.mrb[0].mxu0
    %v1128 = vadd.f32 0.0, %v1127
    %1129 = vmatprep.mubr.f32.mxu0 %v557
    %1130 = vmatmul.mubr.f32.gmra.mrb[0].mxu0 %v307
    %v1131 = vpop.f32.mrb[0].mxu0
    %v1132 = vadd.f32 0.0, %v1131
    %v1133 = vpop.f32.mrb[0].mxu0
    %v1134 = vadd.f32 0.0, %v1133
    %1135 = vmatprep.mubr.f32.mxu0 %v558
    %1136 = vmatmul.mubr.f32.gmra.mrb[0].mxu0 %v308
    %v1137 = vpop.f32.mrb[0].mxu0
    %v1138 = vadd.f32 0.0, %v1137
    %v1139 = vpop.f32.mrb[0].mxu0
    %v1140 = vadd.f32 0.0, %v1139
    %1141 = vmatprep.mubr.f32.mxu0 %v559
    %1142 = vmatmul.mubr.f32.gmra.mrb[0].mxu0 %v309
    %v1143 = vpop.f32.mrb[0].mxu0
    %v1144 = vadd.f32 0.0, %v1143
    %v1145 = vpop.f32.mrb[0].mxu0
    %v1146 = vadd.f32 0.0, %v1145
    %1147 = vmatprep.mubr.f32.mxu0 %v560
    %1148 = vmatmul.mubr.f32.gmra.mrb[0].mxu0 %v310
    %v1149 = vpop.f32.mrb[0].mxu0
    %v1150 = vadd.f32 0.0, %v1149
    %v1151 = vpop.f32.mrb[0].mxu0
    %v1152 = vadd.f32 0.0, %v1151
    %1153 = vmatprep.mubr.f32.mxu0 %v561
    %1154 = vmatmul.mubr.f32.gmra.mrb[0].mxu0 %v311
    %v1155 = vpop.f32.mrb[0].mxu0
    %v1156 = vadd.f32 0.0, %v1155
    %v1157 = vpop.f32.mrb[0].mxu0
    %v1158 = vadd.f32 0.0, %v1157
    %1159 = vmatprep.mubr.f32.mxu0 %v562
    %1160 = vmatmul.mubr.f32.gmra.mrb[0].mxu0 %v312
    %v1161 = vpop.f32.mrb[0].mxu0
    %v1162 = vadd.f32 0.0, %v1161
    %v1163 = vpop.f32.mrb[0].mxu0
    %v1164 = vadd.f32 0.0, %v1163
    %1165 = vdwg.mxu0
    %1166 = vmatprep.subr.mxu0 %v878
    %1167 = vmatpush1.msra.mxu0 %v877
    %1168 = vmatprep.subr.mxu0 %v880
    %1169 = vmatpush1.msra.mxu0 %v879
    %1170 = vmatprep.subr.mxu0 %v882
    %1171 = vmatpush1.msra.mxu0 %v881
    %1172 = vmatprep.subr.mxu0 %v884
    %1173 = vmatpush1.msra.mxu0 %v883
    %1174 = vmatprep.subr.mxu0 %v886
    %1175 = vmatpush1.msra.mxu0 %v885
    %1176 = vmatprep.subr.mxu0 %v888
    %1177 = vmatpush1.msra.mxu0 %v887
    %1178 = vmatprep.subr.mxu0 %v890
    %1179 = vmatpush1.msra.mxu0 %v889
    %1180 = vmatprep.subr.mxu0 %v892
    %1181 = vmatpush1.msra.mxu0 %v891
    %1182 = vmatprep.subr.mxu0 %v894
    %1183 = vmatpush1.msra.mxu0 %v893
    %1184 = vmatprep.subr.mxu0 %v896
    %1185 = vmatpush1.msra.mxu0 %v895
    %1186 = vmatprep.subr.mxu0 %v898
    %1187 = vmatpush1.msra.mxu0 %v897
    %1188 = vmatprep.subr.mxu0 %v900
    %1189 = vmatpush1.msra.mxu0 %v899
    %1190 = vmatprep.subr.mxu0 %v902
    %1191 = vmatpush1.msra.mxu0 %v901
    %1192 = vmatprep.subr.mxu0 %v904
    %1193 = vmatpush1.msra.mxu0 %v903
    %1194 = vmatprep.subr.mxu0 %v906
    %1195 = vmatpush1.msra.mxu0 %v905
    %1196 = vmatprep.subr.mxu0 %v908
    %1197 = vmatpush1.msra.mxu0 %v907
    %1198 = vmatprep.subr.mxu0 0.0
    %1199 = vmatpush1.msra.mxu0 0.0
    %1200 = vmatprep.subr.mxu0 0.0
    %1201 = vmatpush1.msra.mxu0 0.0
    %1202 = vmatprep.subr.mxu0 0.0
    %1203 = vmatpush1.msra.mxu0 0.0
    %1204 = vmatprep.subr.mxu0 0.0
    %1205 = vmatpush1.msra.mxu0 0.0
    %1206 = vmatprep.subr.mxu0 0.0
    %1207 = vmatpush1.msra.mxu0 0.0
    %1208 = vmatprep.subr.mxu0 0.0
    %1209 = vmatpush1.msra.mxu0 0.0
    %1210 = vmatprep.subr.mxu0 0.0
    %1211 = vmatpush1.msra.mxu0 0.0
    %1212 = vmatprep.subr.mxu0 0.0
    %1213 = vmatpush1.msra.mxu0 0.0
    %1214 = vmatprep.subr.mxu0 0.0
    %1215 = vmatpush1.msra.mxu0 0.0
    %1216 = vmatprep.subr.mxu0 0.0
    %1217 = vmatpush1.msra.mxu0 0.0
    %1218 = vmatprep.subr.mxu0 0.0
    %1219 = vmatpush1.msra.mxu0 0.0
    %1220 = vmatprep.subr.mxu0 0.0
    %1221 = vmatpush1.msra.mxu0 0.0
    %1222 = vmatprep.subr.mxu0 0.0
    %1223 = vmatpush1.msra.mxu0 0.0
    %1224 = vmatprep.subr.mxu0 0.0
    %1225 = vmatpush1.msra.mxu0 0.0
    %1226 = vmatprep.subr.mxu0 0.0
    %1227 = vmatpush1.msra.mxu0 0.0
    %1228 = vmatprep.subr.mxu0 0.0
    %1229 = vmatpush1.msra.mxu0 0.0
    %1230 = vmatprep.mubr.f32.mxu0 0.0
    %1231 = vmatmul.mubr.f32.gmra.mrb[0].mxu0 %v781
    %v1232 = vpop.f32.mrb[0].mxu0
    %v1233 = vadd.f32 %v976, %v1232
    %v1234 = vpop.f32.mrb[0].mxu0
    %v1235 = vadd.f32 %v978, %v1234
    %1236 = vmatprep.mubr.f32.mxu0 0.0
    %1237 = vmatmul.mubr.f32.gmra.mrb[0].mxu0 %v782
    %v1238 = vpop.f32.mrb[0].mxu0
    %v1239 = vadd.f32 %v982, %v1238
    %v1240 = vpop.f32.mrb[0].mxu0
    %v1241 = vadd.f32 %v984, %v1240
    %1242 = vmatprep.mubr.f32.mxu0 0.0
    %1243 = vmatmul.mubr.f32.gmra.mrb[0].mxu0 %v783
    %v1244 = vpop.f32.mrb[0].mxu0
    %v1245 = vadd.f32 %v988, %v1244
    %v1246 = vpop.f32.mrb[0].mxu0
    %v1247 = vadd.f32 %v990, %v1246
    %1248 = vmatprep.mubr.f32.mxu0 0.0
    %1249 = vmatmul.mubr.f32.gmra.mrb[0].mxu0 %v784
    %v1250 = vpop.f32.mrb[0].mxu0
    %v1251 = vadd.f32 %v994, %v1250
    %v1252 = vpop.f32.mrb[0].mxu0
    %v1253 = vadd.f32 %v996, %v1252
    %1254 = vmatprep.mubr.f32.mxu0 0.0
    %1255 = vmatmul.mubr.f32.gmra.mrb[0].mxu0 %v785
    %v1256 = vpop.f32.mrb[0].mxu0
    %v1257 = vadd.f32 %v1000, %v1256
    %v1258 = vpop.f32.mrb[0].mxu0
    %v1259 = vadd.f32 %v1002, %v1258
    %1260 = vmatprep.mubr.f32.mxu0 0.0
    %1261 = vmatmul.mubr.f32.gmra.mrb[0].mxu0 %v786
    %v1262 = vpop.f32.mrb[0].mxu0
    %v1263 = vadd.f32 %v1006, %v1262
    %v1264 = vpop.f32.mrb[0].mxu0
    %v1265 = vadd.f32 %v1008, %v1264
    %1266 = vmatprep.mubr.f32.mxu0 0.0
    %1267 = vmatmul.mubr.f32.gmra.mrb[0].mxu0 %v787
    %v1268 = vpop.f32.mrb[0].mxu0
    %v1269 = vadd.f32 %v1012, %v1268
    %v1270 = vpop.f32.mrb[0].mxu0
    %v1271 = vadd.f32 %v1014, %v1270
    %1272 = vmatprep.mubr.f32.mxu0 0.0
    %1273 = vmatmul.mubr.f32.gmra.mrb[0].mxu0 %v788
    %v1274 = vpop.f32.mrb[0].mxu0
    %v1275 = vadd.f32 %v1018, %v1274
    %v1276 = vpop.f32.mrb[0].mxu0
    %v1277 = vadd.f32 %v1020, %v1276
    %1278 = vmatprep.mubr.f32.mxu0 0.0
    %1279 = vmatmul.mubr.f32.gmra.mrb[0].mxu0 %v789
    %v1280 = vpop.f32.mrb[0].mxu0
    %v1281 = vadd.f32 %v1024, %v1280
    %v1282 = vpop.f32.mrb[0].mxu0
    %v1283 = vadd.f32 %v1026, %v1282
    %1284 = vmatprep.mubr.f32.mxu0 0.0
    %1285 = vmatmul.mubr.f32.gmra.mrb[0].mxu0 %v790
    %v1286 = vpop.f32.mrb[0].mxu0
    %v1287 = vadd.f32 %v1030, %v1286
    %v1288 = vpop.f32.mrb[0].mxu0
    %v1289 = vadd.f32 %v1032, %v1288
    %1290 = vmatprep.mubr.f32.mxu0 0.0
    %1291 = vmatmul.mubr.f32.gmra.mrb[0].mxu0 %v791
    %v1292 = vpop.f32.mrb[0].mxu0
    %v1293 = vadd.f32 %v1036, %v1292
    %v1294 = vpop.f32.mrb[0].mxu0
    %v1295 = vadd.f32 %v1038, %v1294
    %1296 = vmatprep.mubr.f32.mxu0 0.0
    %1297 = vmatmul.mubr.f32.gmra.mrb[0].mxu0 %v792
    %v1298 = vpop.f32.mrb[0].mxu0
    %v1299 = vadd.f32 %v1042, %v1298
    %v1300 = vpop.f32.mrb[0].mxu0
    %v1301 = vadd.f32 %v1044, %v1300
    %1302 = vmatprep.mubr.f32.mxu0 0.0
    %1303 = vmatmul.mubr.f32.gmra.mrb[0].mxu0 %v793
    %v1304 = vpop.f32.mrb[0].mxu0
    %v1305 = vadd.f32 %v1048, %v1304
    %v1306 = vpop.f32.mrb[0].mxu0
    %v1307 = vadd.f32 %v1050, %v1306
    %1308 = vmatprep.mubr.f32.mxu0 0.0
    %1309 = vmatmul.mubr.f32.gmra.mrb[0].mxu0 %v794
    %v1310 = vpop.f32.mrb[0].mxu0
    %v1311 = vadd.f32 %v1054, %v1310
    %v1312 = vpop.f32.mrb[0].mxu0
    %v1313 = vadd.f32 %v1056, %v1312
    %1314 = vmatprep.mubr.f32.mxu0 0.0
    %1315 = vmatmul.mubr.f32.gmra.mrb[0].mxu0 %v795
    %v1316 = vpop.f32.mrb[0].mxu0
    %v1317 = vadd.f32 %v1060, %v1316
    %v1318 = vpop.f32.mrb[0].mxu0
    %v1319 = vadd.f32 %v1062, %v1318
    %1320 = vmatprep.mubr.f32.mxu0 0.0
    %1321 = vmatmul.mubr.f32.gmra.mrb[0].mxu0 %v796
    %v1322 = vpop.f32.mrb[0].mxu0
    %v1323 = vadd.f32 %v1066, %v1322
    %v1324 = vpop.f32.mrb[0].mxu0
    %v1325 = vadd.f32 %v1068, %v1324
    %1326 = vmatprep.mubr.f32.mxu0 0.0
    %1327 = vmatmul.mubr.f32.gmra.mrb[0].mxu0 %v797
    %v1328 = vpop.f32.mrb[0].mxu0
    %v1329 = vadd.f32 %v1072, %v1328
    %v1330 = vpop.f32.mrb[0].mxu0
    %v1331 = vadd.f32 %v1074, %v1330
    %1332 = vmatprep.mubr.f32.mxu0 0.0
    %1333 = vmatmul.mubr.f32.gmra.mrb[0].mxu0 %v798
    %v1334 = vpop.f32.mrb[0].mxu0
    %v1335 = vadd.f32 %v1078, %v1334
    %v1336 = vpop.f32.mrb[0].mxu0
    %v1337 = vadd.f32 %v1080, %v1336
    %1338 = vmatprep.mubr.f32.mxu0 0.0
    %1339 = vmatmul.mubr.f32.gmra.mrb[0].mxu0 %v799
    %v1340 = vpop.f32.mrb[0].mxu0
    %v1341 = vadd.f32 %v1084, %v1340
    %v1342 = vpop.f32.mrb[0].mxu0
    %v1343 = vadd.f32 %v1086, %v1342
    %1344 = vmatprep.mubr.f32.mxu0 0.0
    %1345 = vmatmul.mubr.f32.gmra.mrb[0].mxu0 %v800
    %v1346 = vpop.f32.mrb[0].mxu0
    %v1347 = vadd.f32 %v1090, %v1346
    %v1348 = vpop.f32.mrb[0].mxu0
    %v1349 = vadd.f32 %v1092, %v1348
    %1350 = vmatprep.mubr.f32.mxu0 0.0
    %1351 = vmatmul.mubr.f32.gmra.mrb[0].mxu0 %v801
    %v1352 = vpop.f32.mrb[0].mxu0
    %v1353 = vadd.f32 %v1096, %v1352
    %v1354 = vpop.f32.mrb[0].mxu0
    %v1355 = vadd.f32 %v1098, %v1354
    %1356 = vmatprep.mubr.f32.mxu0 0.0
    %1357 = vmatmul.mubr.f32.gmra.mrb[0].mxu0 %v802
    %v1358 = vpop.f32.mrb[0].mxu0
    %v1359 = vadd.f32 %v1102, %v1358
    %v1360 = vpop.f32.mrb[0].mxu0
    %v1361 = vadd.f32 %v1104, %v1360
    %1362 = vmatprep.mubr.f32.mxu0 0.0
    %1363 = vmatmul.mubr.f32.gmra.mrb[0].mxu0 %v803
    %v1364 = vpop.f32.mrb[0].mxu0
    %v1365 = vadd.f32 %v1108, %v1364
    %v1366 = vpop.f32.mrb[0].mxu0
    %v1367 = vadd.f32 %v1110, %v1366
    %1368 = vmatprep.mubr.f32.mxu0 0.0
    %1369 = vmatmul.mubr.f32.gmra.mrb[0].mxu0 %v804
    %v1370 = vpop.f32.mrb[0].mxu0
    %v1371 = vadd.f32 %v1114, %v1370
    %v1372 = vpop.f32.mrb[0].mxu0
    %v1373 = vadd.f32 %v1116, %v1372
    %1374 = vmatprep.mubr.f32.mxu0 0.0
    %1375 = vmatmul.mubr.f32.gmra.mrb[0].mxu0 %v805
    %v1376 = vpop.f32.mrb[0].mxu0
    %v1377 = vadd.f32 %v1120, %v1376
    %v1378 = vpop.f32.mrb[0].mxu0
    %v1379 = vadd.f32 %v1122, %v1378
    %1380 = vmatprep.mubr.f32.mxu0 0.0
    %1381 = vmatmul.mubr.f32.gmra.mrb[0].mxu0 %v806
    %v1382 = vpop.f32.mrb[0].mxu0
    %v1383 = vadd.f32 %v1126, %v1382
    %v1384 = vpop.f32.mrb[0].mxu0
    %v1385 = vadd.f32 %v1128, %v1384
    %1386 = vmatprep.mubr.f32.mxu0 0.0
    %1387 = vmatmul.mubr.f32.gmra.mrb[0].mxu0 %v807
    %v1388 = vpop.f32.mrb[0].mxu0
    %v1389 = vadd.f32 %v1132, %v1388
    %v1390 = vpop.f32.mrb[0].mxu0
    %v1391 = vadd.f32 %v1134, %v1390
    %1392 = vmatprep.mubr.f32.mxu0 0.0
    %1393 = vmatmul.mubr.f32.gmra.mrb[0].mxu0 %v808
    %v1394 = vpop.f32.mrb[0].mxu0
    %v1395 = vadd.f32 %v1138, %v1394
    %v1396 = vpop.f32.mrb[0].mxu0
    %v1397 = vadd.f32 %v1140, %v1396
    %1398 = vmatprep.mubr.f32.mxu0 0.0
    %1399 = vmatmul.mubr.f32.gmra.mrb[0].mxu0 %v809
    %v1400 = vpop.f32.mrb[0].mxu0
    %v1401 = vadd.f32 %v1144, %v1400
    %v1402 = vpop.f32.mrb[0].mxu0
    %v1403 = vadd.f32 %v1146, %v1402
    %1404 = vmatprep.mubr.f32.mxu0 0.0
    %1405 = vmatmul.mubr.f32.gmra.mrb[0].mxu0 %v810
    %v1406 = vpop.f32.mrb[0].mxu0
    %v1407 = vadd.f32 %v1150, %v1406
    %v1408 = vpop.f32.mrb[0].mxu0
    %v1409 = vadd.f32 %v1152, %v1408
    %1410 = vmatprep.mubr.f32.mxu0 0.0
    %1411 = vmatmul.mubr.f32.gmra.mrb[0].mxu0 %v811
    %v1412 = vpop.f32.mrb[0].mxu0
    %v1413 = vadd.f32 %v1156, %v1412
    %v1414 = vpop.f32.mrb[0].mxu0
    %v1415 = vadd.f32 %v1158, %v1414
    %1416 = vmatprep.mubr.f32.mxu0 0.0
    %1417 = vmatmul.mubr.f32.gmra.mrb[0].mxu0 %v812
    %v1418 = vpop.f32.mrb[0].mxu0
    %v1419 = vadd.f32 %v1162, %v1418
    %v1420 = vpop.f32.mrb[0].mxu0
    %v1421 = vadd.f32 %v1164, %v1420
    %1422 = vdwg.mxu0
    %v1423 = vlaneseq
    %v1424 = vshrl.u32 %v1423, 7
    %v1425 = vadd.s32 %v1424, 8
    %v1426 = vadd.s32 %v1424, 16
    %v1427 = vadd.s32 %v1424, 24
    %v1428 = vadd.s32 %v63, 128
    %vm1429 = vcmp.ge.s32.totalorder %v63, 64
    %vm1430 = vcmp.ge.s32.totalorder %v1428, 64
    %vm1431 = vcmp.lt.s32.totalorder %v63, 128
    %vm1432 = vcmp.lt.s32.totalorder %v1428, 128
    %vm1433 = vmand %vm1429, %vm1431
    %vm1434 = vmand %vm1430, %vm1432
    %v1435 = vsel %vm1433, 31, 30
    %v1436 = vsel %vm1434, 31, 30
    %vm1437 = vcmp.lt.s32.totalorder %v1424, %v1435
    %vm1438 = vcmp.lt.s32.totalorder %v1424, %v1436
    %vm1439 = vcmp.lt.s32.totalorder %v1425, %v1435
    %vm1440 = vcmp.lt.s32.totalorder %v1425, %v1436
    %vm1441 = vcmp.lt.s32.totalorder %v1426, %v1435
    %vm1442 = vcmp.lt.s32.totalorder %v1426, %v1436
    %vm1443 = vcmp.lt.s32.totalorder %v1427, %v1435
    %vm1444 = vcmp.lt.s32.totalorder %v1427, %v1436
    %v1445 = vsel %vm1437, 1, 0
    %v1446 = vsel %vm1438, 1, 0
    %v1447 = vsel %vm1439, 1, 0
    %v1448 = vsel %vm1440, 1, 0
    %v1449 = vsel %vm1441, 1, 0
    %v1450 = vsel %vm1442, 1, 0
    %v1451 = vsel %vm1443, 1, 0
    %v1452 = vsel %vm1444, 1, 0
    %vm1453 = vcmp.eq.s32.totalorder %v1445, 1
    %vm1454 = vcmp.eq.s32.totalorder %v1446, 1
    %vm1455 = vcmp.eq.s32.totalorder %v1447, 1
    %vm1456 = vcmp.eq.s32.totalorder %v1448, 1
    %vm1457 = vcmp.eq.s32.totalorder %v1449, 1
    %vm1458 = vcmp.eq.s32.totalorder %v1450, 1
    %vm1459 = vcmp.eq.s32.totalorder %v1451, 1
    %vm1460 = vcmp.eq.s32.totalorder %v1452, 1
    %v1461 = vsel %vm1453, %v1233, -1e+30
    %v1462 = vsel %vm1454, %v1235, -1e+30
    %v1463 = vsel %vm1455, %v1239, -1e+30
    %v1464 = vsel %vm1456, %v1241, -1e+30
    %v1465 = vsel %vm1457, %v1245, -1e+30
    %v1466 = vsel %vm1458, %v1247, -1e+30
    %v1467 = vsel %vm1459, %v1251, -1e+30
    %v1468 = vsel %vm1460, %v1253, -1e+30
    %v1469 = vsel %vm1453, %v1257, -1e+30
    %v1470 = vsel %vm1454, %v1259, -1e+30
    %v1471 = vsel %vm1455, %v1263, -1e+30
    %v1472 = vsel %vm1456, %v1265, -1e+30
    %v1473 = vsel %vm1457, %v1269, -1e+30
    %v1474 = vsel %vm1458, %v1271, -1e+30
    %v1475 = vsel %vm1459, %v1275, -1e+30
    %v1476 = vsel %vm1460, %v1277, -1e+30
    %v1477 = vsel %vm1453, %v1281, -1e+30
    %v1478 = vsel %vm1454, %v1283, -1e+30
    %v1479 = vsel %vm1455, %v1287, -1e+30
    %v1480 = vsel %vm1456, %v1289, -1e+30
    %v1481 = vsel %vm1457, %v1293, -1e+30
    %v1482 = vsel %vm1458, %v1295, -1e+30
    %v1483 = vsel %vm1459, %v1299, -1e+30
    %v1484 = vsel %vm1460, %v1301, -1e+30
    %v1485 = vsel %vm1453, %v1305, -1e+30
    %v1486 = vsel %vm1454, %v1307, -1e+30
    %v1487 = vsel %vm1455, %v1311, -1e+30
    %v1488 = vsel %vm1456, %v1313, -1e+30
    %v1489 = vsel %vm1457, %v1317, -1e+30
    %v1490 = vsel %vm1458, %v1319, -1e+30
    %v1491 = vsel %vm1459, %v1323, -1e+30
    %v1492 = vsel %vm1460, %v1325, -1e+30
    %v1493 = vsel %vm1453, %v1329, -1e+30
    %v1494 = vsel %vm1454, %v1331, -1e+30
    %v1495 = vsel %vm1455, %v1335, -1e+30
    %v1496 = vsel %vm1456, %v1337, -1e+30
    %v1497 = vsel %vm1457, %v1341, -1e+30
    %v1498 = vsel %vm1458, %v1343, -1e+30
    %v1499 = vsel %vm1459, %v1347, -1e+30
    %v1500 = vsel %vm1460, %v1349, -1e+30
    %v1501 = vsel %vm1453, %v1353, -1e+30
    %v1502 = vsel %vm1454, %v1355, -1e+30
    %v1503 = vsel %vm1455, %v1359, -1e+30
    %v1504 = vsel %vm1456, %v1361, -1e+30
    %v1505 = vsel %vm1457, %v1365, -1e+30
    %v1506 = vsel %vm1458, %v1367, -1e+30
    %v1507 = vsel %vm1459, %v1371, -1e+30
    %v1508 = vsel %vm1460, %v1373, -1e+30
    %v1509 = vsel %vm1453, %v1377, -1e+30
    %v1510 = vsel %vm1454, %v1379, -1e+30
    %v1511 = vsel %vm1455, %v1383, -1e+30
    %v1512 = vsel %vm1456, %v1385, -1e+30
    %v1513 = vsel %vm1457, %v1389, -1e+30
    %v1514 = vsel %vm1458, %v1391, -1e+30
    %v1515 = vsel %vm1459, %v1395, -1e+30
    %v1516 = vsel %vm1460, %v1397, -1e+30
    %v1517 = vsel %vm1453, %v1401, -1e+30
    %v1518 = vsel %vm1454, %v1403, -1e+30
    %v1519 = vsel %vm1455, %v1407, -1e+30
    %v1520 = vsel %vm1456, %v1409, -1e+30
    %v1521 = vsel %vm1457, %v1413, -1e+30
    %v1522 = vsel %vm1458, %v1415, -1e+30
    %v1523 = vsel %vm1459, %v1419, -1e+30
    %v1524 = vsel %vm1460, %v1421, -1e+30
    %v1525 = vmax.f32 %v1461, %v1463
    %v1526 = vmax.f32 %v1525, %v1465
    %v1527 = vmax.f32 %v1526, %v1467
    %v1528 = vrot.slane %v1527, 4
    %v1529 = vmax.f32 %v1527, %v1528
    %v1530 = vrot.slane %v1529, 2
    %v1531 = vmax.f32 %v1529, %v1530
    %v1532 = vrot.slane %v1531, 1
    %v1533 = vmax.f32 %v1531, %v1532
    %v1534 = vmax.f32 %v1462, %v1464
    %v1535 = vmax.f32 %v1534, %v1466
    %v1536 = vmax.f32 %v1535, %v1468
    %v1537 = vrot.slane %v1536, 4
    %v1538 = vmax.f32 %v1536, %v1537
    %v1539 = vrot.slane %v1538, 2
    %v1540 = vmax.f32 %v1538, %v1539
    %v1541 = vrot.slane %v1540, 1
    %v1542 = vmax.f32 %v1540, %v1541
    %v1543 = vmax.f32 %v1469, %v1471
    %v1544 = vmax.f32 %v1543, %v1473
    %v1545 = vmax.f32 %v1544, %v1475
    %v1546 = vrot.slane %v1545, 4
    %v1547 = vmax.f32 %v1545, %v1546
    %v1548 = vrot.slane %v1547, 2
    %v1549 = vmax.f32 %v1547, %v1548
    %v1550 = vrot.slane %v1549, 1
    %v1551 = vmax.f32 %v1549, %v1550
    %v1552 = vmax.f32 %v1470, %v1472
    %v1553 = vmax.f32 %v1552, %v1474
    %v1554 = vmax.f32 %v1553, %v1476
    %v1555 = vrot.slane %v1554, 4
    %v1556 = vmax.f32 %v1554, %v1555
    %v1557 = vrot.slane %v1556, 2
    %v1558 = vmax.f32 %v1556, %v1557
    %v1559 = vrot.slane %v1558, 1
    %v1560 = vmax.f32 %v1558, %v1559
    %v1561 = vmax.f32 %v1477, %v1479
    %v1562 = vmax.f32 %v1561, %v1481
    %v1563 = vmax.f32 %v1562, %v1483
    %v1564 = vrot.slane %v1563, 4
    %v1565 = vmax.f32 %v1563, %v1564
    %v1566 = vrot.slane %v1565, 2
    %v1567 = vmax.f32 %v1565, %v1566
    %v1568 = vrot.slane %v1567, 1
    %v1569 = vmax.f32 %v1567, %v1568
    %v1570 = vmax.f32 %v1478, %v1480
    %v1571 = vmax.f32 %v1570, %v1482
    %v1572 = vmax.f32 %v1571, %v1484
    %v1573 = vrot.slane %v1572, 4
    %v1574 = vmax.f32 %v1572, %v1573
    %v1575 = vrot.slane %v1574, 2
    %v1576 = vmax.f32 %v1574, %v1575
    %v1577 = vrot.slane %v1576, 1
    %v1578 = vmax.f32 %v1576, %v1577
    %v1579 = vmax.f32 %v1485, %v1487
    %v1580 = vmax.f32 %v1579, %v1489
    %v1581 = vmax.f32 %v1580, %v1491
    %v1582 = vrot.slane %v1581, 4
    %v1583 = vmax.f32 %v1581, %v1582
    %v1584 = vrot.slane %v1583, 2
    %v1585 = vmax.f32 %v1583, %v1584
    %v1586 = vrot.slane %v1585, 1
    %v1587 = vmax.f32 %v1585, %v1586
    %v1588 = vmax.f32 %v1486, %v1488
    %v1589 = vmax.f32 %v1588, %v1490
    %v1590 = vmax.f32 %v1589, %v1492
    %v1591 = vrot.slane %v1590, 4
    %v1592 = vmax.f32 %v1590, %v1591
    %v1593 = vrot.slane %v1592, 2
    %v1594 = vmax.f32 %v1592, %v1593
    %v1595 = vrot.slane %v1594, 1
    %v1596 = vmax.f32 %v1594, %v1595
    %v1597 = vmax.f32 %v1493, %v1495
    %v1598 = vmax.f32 %v1597, %v1497
    %v1599 = vmax.f32 %v1598, %v1499
    %v1600 = vrot.slane %v1599, 4
    %v1601 = vmax.f32 %v1599, %v1600
    %v1602 = vrot.slane %v1601, 2
    %v1603 = vmax.f32 %v1601, %v1602
    %v1604 = vrot.slane %v1603, 1
    %v1605 = vmax.f32 %v1603, %v1604
    %v1606 = vmax.f32 %v1494, %v1496
    %v1607 = vmax.f32 %v1606, %v1498
    %v1608 = vmax.f32 %v1607, %v1500
    %v1609 = vrot.slane %v1608, 4
    %v1610 = vmax.f32 %v1608, %v1609
    %v1611 = vrot.slane %v1610, 2
    %v1612 = vmax.f32 %v1610, %v1611
    %v1613 = vrot.slane %v1612, 1
    %v1614 = vmax.f32 %v1612, %v1613
    %v1615 = vmax.f32 %v1501, %v1503
    %v1616 = vmax.f32 %v1615, %v1505
    %v1617 = vmax.f32 %v1616, %v1507
    %v1618 = vrot.slane %v1617, 4
    %v1619 = vmax.f32 %v1617, %v1618
    %v1620 = vrot.slane %v1619, 2
    %v1621 = vmax.f32 %v1619, %v1620
    %v1622 = vrot.slane %v1621, 1
    %v1623 = vmax.f32 %v1621, %v1622
    %v1624 = vmax.f32 %v1502, %v1504
    %v1625 = vmax.f32 %v1624, %v1506
    %v1626 = vmax.f32 %v1625, %v1508
    %v1627 = vrot.slane %v1626, 4
    %v1628 = vmax.f32 %v1626, %v1627
    %v1629 = vrot.slane %v1628, 2
    %v1630 = vmax.f32 %v1628, %v1629
    %v1631 = vrot.slane %v1630, 1
    %v1632 = vmax.f32 %v1630, %v1631
    %v1633 = vmax.f32 %v1509, %v1511
    %v1634 = vmax.f32 %v1633, %v1513
    %v1635 = vmax.f32 %v1634, %v1515
    %v1636 = vrot.slane %v1635, 4
    %v1637 = vmax.f32 %v1635, %v1636
    %v1638 = vrot.slane %v1637, 2
    %v1639 = vmax.f32 %v1637, %v1638
    %v1640 = vrot.slane %v1639, 1
    %v1641 = vmax.f32 %v1639, %v1640
    %v1642 = vmax.f32 %v1510, %v1512
    %v1643 = vmax.f32 %v1642, %v1514
    %v1644 = vmax.f32 %v1643, %v1516
    %v1645 = vrot.slane %v1644, 4
    %v1646 = vmax.f32 %v1644, %v1645
    %v1647 = vrot.slane %v1646, 2
    %v1648 = vmax.f32 %v1646, %v1647
    %v1649 = vrot.slane %v1648, 1
    %v1650 = vmax.f32 %v1648, %v1649
    %v1651 = vmax.f32 %v1517, %v1519
    %v1652 = vmax.f32 %v1651, %v1521
    %v1653 = vmax.f32 %v1652, %v1523
    %v1654 = vrot.slane %v1653, 4
    %v1655 = vmax.f32 %v1653, %v1654
    %v1656 = vrot.slane %v1655, 2
    %v1657 = vmax.f32 %v1655, %v1656
    %v1658 = vrot.slane %v1657, 1
    %v1659 = vmax.f32 %v1657, %v1658
    %v1660 = vmax.f32 %v1518, %v1520
    %v1661 = vmax.f32 %v1660, %v1522
    %v1662 = vmax.f32 %v1661, %v1524
    %v1663 = vrot.slane %v1662, 4
    %v1664 = vmax.f32 %v1662, %v1663
    %v1665 = vrot.slane %v1664, 2
    %v1666 = vmax.f32 %v1664, %v1665
    %v1667 = vrot.slane %v1666, 1
    %v1668 = vmax.f32 %v1666, %v1667
    %v1669 = vld [vmem:[%s2] sm:$0x3]
    %v1671 = vlaneseq
    %v1672 = vshrl.u32 %v1671, 7
    %v1673 = vsub.s32 0, %v1672
    %v1674 = vrot.slane %v1669, %v1673
    %v1675 = vlaneseq
    %v1676 = vshrl.u32 %v1675, 7
    %v1677 = vsub.s32 1, %v1676
    %v1678 = vrot.slane %v1669, %v1677
    %v1681 = vadd.f32 %v1533, %v1674
    %v1682 = vadd.f32 %v1542, %v1678
    %v1683 = vadd.f32 %v1551, %v1674
    %v1684 = vadd.f32 %v1560, %v1678
    %v1685 = vadd.f32 %v1569, %v1674
    %v1686 = vadd.f32 %v1578, %v1678
    %v1687 = vadd.f32 %v1587, %v1674
    %v1688 = vadd.f32 %v1596, %v1678
    %v1689 = vadd.f32 %v1605, %v1674
    %v1690 = vadd.f32 %v1614, %v1678
    %v1691 = vadd.f32 %v1623, %v1674
    %v1692 = vadd.f32 %v1632, %v1678
    %v1693 = vadd.f32 %v1641, %v1674
    %v1694 = vadd.f32 %v1650, %v1678
    %v1695 = vadd.f32 %v1659, %v1674
    %v1696 = vadd.f32 %v1668, %v1678
    %v1697 = vmax.f32 %v1681, 0.0
    %v1698 = vmax.f32 %v1682, 0.0
    %v1699 = vmax.f32 %v1683, 0.0
    %v1700 = vmax.f32 %v1684, 0.0
    %v1701 = vmax.f32 %v1685, 0.0
    %v1702 = vmax.f32 %v1686, 0.0
    %v1703 = vmax.f32 %v1687, 0.0
    %v1704 = vmax.f32 %v1688, 0.0
    %v1705 = vmax.f32 %v1689, 0.0
    %v1706 = vmax.f32 %v1690, 0.0
    %v1707 = vmax.f32 %v1691, 0.0
    %v1708 = vmax.f32 %v1692, 0.0
    %v1709 = vmax.f32 %v1693, 0.0
    %v1710 = vmax.f32 %v1694, 0.0
    %v1711 = vmax.f32 %v1695, 0.0
    %v1712 = vmax.f32 %v1696, 0.0
    %v1713 = vld [vmem:[#allocation7] sm:$0xff]
    %v1714 = vld [vmem:[#allocation7 + $0x8] sm:$0xff]
    %v1715 = vld [vmem:[#allocation7 + $0x10] sm:$0xff]
    %v1716 = vld [vmem:[#allocation7 + $0x18] sm:$0xff]
    %v1717 = vld [vmem:[#allocation7 + $0x20] sm:$0xff]
    %v1718 = vld [vmem:[#allocation7 + $0x28] sm:$0xff]
    %v1719 = vld [vmem:[#allocation7 + $0x30] sm:$0xff]
    %v1720 = vld [vmem:[#allocation7 + $0x38] sm:$0xff]
    %v1721 = vld [vmem:[#allocation7 + $0x40] sm:$0xff]
    %v1722 = vld [vmem:[#allocation7 + $0x48] sm:$0xff]
    %v1723 = vld [vmem:[#allocation7 + $0x50] sm:$0xff]
    %v1724 = vld [vmem:[#allocation7 + $0x58] sm:$0xff]
    %v1725 = vld [vmem:[#allocation7 + $0x60] sm:$0xff]
    %v1726 = vld [vmem:[#allocation7 + $0x68] sm:$0xff]
    %v1727 = vld [vmem:[#allocation7 + $0x70] sm:$0xff]
    %v1728 = vld [vmem:[#allocation7 + $0x78] sm:$0xff]
    %v1729 = vld [vmem:[#allocation7 + $0x80] sm:$0xff]
    %v1730 = vld [vmem:[#allocation7 + $0x88] sm:$0xff]
    %v1731 = vld [vmem:[#allocation7 + $0x90] sm:$0xff]
    %v1732 = vld [vmem:[#allocation7 + $0x98] sm:$0xff]
    %v1733 = vld [vmem:[#allocation7 + $0xa0] sm:$0xff]
    %v1734 = vld [vmem:[#allocation7 + $0xa8] sm:$0xff]
    %v1735 = vld [vmem:[#allocation7 + $0xb0] sm:$0xff]
    %v1736 = vld [vmem:[#allocation7 + $0xb8] sm:$0xff]
    %v1737 = vld [vmem:[#allocation7 + $0xc0] sm:$0xff]
    %v1738 = vld [vmem:[#allocation7 + $0xc8] sm:$0xff]
    %v1739 = vld [vmem:[#allocation7 + $0xd0] sm:$0xff]
    %v1740 = vld [vmem:[#allocation7 + $0xd8] sm:$0xff]
    %v1741 = vld [vmem:[#allocation7 + $0xe0] sm:$0xff]
    %v1742 = vld [vmem:[#allocation7 + $0xe8] sm:$0xff]
    %v1743 = vld [vmem:[#allocation7 + $0xf0] sm:$0xff]
    %v1744 = vld [vmem:[#allocation7 + $0xf8] sm:$0xff]
    %v1745 = vld [vmem:[#allocation7 + $0x100] sm:$0xff]
    %v1746 = vld [vmem:[#allocation7 + $0x108] sm:$0xff]
    %v1747 = vld [vmem:[#allocation7 + $0x110] sm:$0xff]
    %v1748 = vld [vmem:[#allocation7 + $0x118] sm:$0xff]
    %v1749 = vld [vmem:[#allocation7 + $0x120] sm:$0xff]
    %v1750 = vld [vmem:[#allocation7 + $0x128] sm:$0xff]
    %v1751 = vld [vmem:[#allocation7 + $0x130] sm:$0xff]
    %v1752 = vld [vmem:[#allocation7 + $0x138] sm:$0xff]
    %v1753 = vld [vmem:[#allocation7 + $0x140] sm:$0xff]
    %v1754 = vld [vmem:[#allocation7 + $0x148] sm:$0xff]
    %v1755 = vld [vmem:[#allocation7 + $0x150] sm:$0xff]
    %v1756 = vld [vmem:[#allocation7 + $0x158] sm:$0xff]
    %v1757 = vld [vmem:[#allocation7 + $0x160] sm:$0xff]
    %v1758 = vld [vmem:[#allocation7 + $0x168] sm:$0xff]
    %v1759 = vld [vmem:[#allocation7 + $0x170] sm:$0xff]
    %v1760 = vld [vmem:[#allocation7 + $0x178] sm:$0xff]
    %v1761 = vld [vmem:[#allocation7 + $0x180] sm:$0xff]
    %v1762 = vld [vmem:[#allocation7 + $0x188] sm:$0xff]
    %v1763 = vld [vmem:[#allocation7 + $0x190] sm:$0xff]
    %v1764 = vld [vmem:[#allocation7 + $0x198] sm:$0xff]
    %v1765 = vld [vmem:[#allocation7 + $0x1a0] sm:$0xff]
    %v1766 = vld [vmem:[#allocation7 + $0x1a8] sm:$0xff]
    %v1767 = vld [vmem:[#allocation7 + $0x1b0] sm:$0xff]
    %v1768 = vld [vmem:[#allocation7 + $0x1b8] sm:$0xff]
    %v1769 = vld [vmem:[#allocation7 + $0x1c0] sm:$0xff]
    %v1770 = vld [vmem:[#allocation7 + $0x1c8] sm:$0xff]
    %v1771 = vld [vmem:[#allocation7 + $0x1d0] sm:$0xff]
    %v1772 = vld [vmem:[#allocation7 + $0x1d8] sm:$0xff]
    %v1773 = vld [vmem:[#allocation7 + $0x1e0] sm:$0xff]
    %v1774 = vld [vmem:[#allocation7 + $0x1e8] sm:$0xff]
    %v1775 = vld [vmem:[#allocation7 + $0x1f0] sm:$0xff]
    %v1776 = vld [vmem:[#allocation7 + $0x1f8] sm:$0xff]
    %v1777 = vld [vmem:[%s4] sm:$0x3]
    %v1779 = vlaneseq
    %v1780 = vshrl.u32 %v1779, 7
    %v1781 = vsub.s32 0, %v1780
    %v1782 = vrot.slane %v1777, %v1781
    %v1783 = vlaneseq
    %v1784 = vshrl.u32 %v1783, 7
    %v1785 = vsub.s32 1, %v1784
    %v1786 = vrot.slane %v1777, %v1785
    %v1805 = vrot.slane %v1699, 7
    %vm1806 = vcmask 1041409
    %v1807 = vsel %vm1806, %v1805, %v1697
    %v1808 = vrot.slane %v1701, 6
    %vm1809 = vcmask 1042434
    %v1810 = vsel %vm1809, %v1808, %v1807
    %v1811 = vrot.slane %v1703, 5
    %vm1812 = vcmask 1043459
    %v1813 = vsel %vm1812, %v1811, %v1810
    %v1814 = vrot.slane %v1705, 4
    %vm1815 = vcmask 1044484
    %v1816 = vsel %vm1815, %v1814, %v1813
    %v1817 = vrot.slane %v1707, 3
    %vm1818 = vcmask 1045509
    %v1819 = vsel %vm1818, %v1817, %v1816
    %v1820 = vrot.slane %v1709, 2
    %vm1821 = vcmask 1046534
    %v1822 = vsel %vm1821, %v1820, %v1819
    %v1823 = vrot.slane %v1711, 1
    %vm1824 = vcmask 1047559
    %v1825 = vsel %vm1824, %v1823, %v1822
    %v1826 = vrot.slane %v1700, 7
    %v1827 = vsel %vm1806, %v1826, %v1698
    %v1828 = vrot.slane %v1702, 6
    %v1829 = vsel %vm1809, %v1828, %v1827
    %v1830 = vrot.slane %v1704, 5
    %v1831 = vsel %vm1812, %v1830, %v1829
    %v1832 = vrot.slane %v1706, 4
    %v1833 = vsel %vm1815, %v1832, %v1831
    %v1834 = vrot.slane %v1708, 3
    %v1835 = vsel %vm1818, %v1834, %v1833
    %v1836 = vrot.slane %v1710, 2
    %v1837 = vsel %vm1821, %v1836, %v1835
    %v1838 = vrot.slane %v1712, 1
    %v1839 = vsel %vm1824, %v1838, %v1837
    %1842 = vmatprep.subr.mxu0 %v1714
    %1843 = vmatpush1.msra.mxu0 %v1713
    %1844 = vmatprep.subr.mxu0 %v1716
    %1845 = vmatpush1.msra.mxu0 %v1715
    %1846 = vmatprep.subr.mxu0 %v1718
    %1847 = vmatpush1.msra.mxu0 %v1717
    %1848 = vmatprep.subr.mxu0 %v1720
    %1849 = vmatpush1.msra.mxu0 %v1719
    %1850 = vmatprep.subr.mxu0 %v1722
    %1851 = vmatpush1.msra.mxu0 %v1721
    %1852 = vmatprep.subr.mxu0 %v1724
    %1853 = vmatpush1.msra.mxu0 %v1723
    %1854 = vmatprep.subr.mxu0 %v1726
    %1855 = vmatpush1.msra.mxu0 %v1725
    %1856 = vmatprep.subr.mxu0 %v1728
    %1857 = vmatpush1.msra.mxu0 %v1727
    %1858 = vmatprep.subr.mxu0 %v1730
    %1859 = vmatpush1.msra.mxu0 %v1729
    %1860 = vmatprep.subr.mxu0 %v1732
    %1861 = vmatpush1.msra.mxu0 %v1731
    %1862 = vmatprep.subr.mxu0 %v1734
    %1863 = vmatpush1.msra.mxu0 %v1733
    %1864 = vmatprep.subr.mxu0 %v1736
    %1865 = vmatpush1.msra.mxu0 %v1735
    %1866 = vmatprep.subr.mxu0 %v1738
    %1867 = vmatpush1.msra.mxu0 %v1737
    %1868 = vmatprep.subr.mxu0 %v1740
    %1869 = vmatpush1.msra.mxu0 %v1739
    %1870 = vmatprep.subr.mxu0 %v1742
    %1871 = vmatpush1.msra.mxu0 %v1741
    %1872 = vmatprep.subr.mxu0 %v1744
    %1873 = vmatpush1.msra.mxu0 %v1743
    %1874 = vmatprep.subr.mxu0 %v1746
    %1875 = vmatpush1.msra.mxu0 %v1745
    %1876 = vmatprep.subr.mxu0 %v1748
    %1877 = vmatpush1.msra.mxu0 %v1747
    %1878 = vmatprep.subr.mxu0 %v1750
    %1879 = vmatpush1.msra.mxu0 %v1749
    %1880 = vmatprep.subr.mxu0 %v1752
    %1881 = vmatpush1.msra.mxu0 %v1751
    %1882 = vmatprep.subr.mxu0 %v1754
    %1883 = vmatpush1.msra.mxu0 %v1753
    %1884 = vmatprep.subr.mxu0 %v1756
    %1885 = vmatpush1.msra.mxu0 %v1755
    %1886 = vmatprep.subr.mxu0 %v1758
    %1887 = vmatpush1.msra.mxu0 %v1757
    %1888 = vmatprep.subr.mxu0 %v1760
    %1889 = vmatpush1.msra.mxu0 %v1759
    %1890 = vmatprep.subr.mxu0 %v1762
    %1891 = vmatpush1.msra.mxu0 %v1761
    %1892 = vmatprep.subr.mxu0 %v1764
    %1893 = vmatpush1.msra.mxu0 %v1763
    %1894 = vmatprep.subr.mxu0 %v1766
    %1895 = vmatpush1.msra.mxu0 %v1765
    %1896 = vmatprep.subr.mxu0 %v1768
    %1897 = vmatpush1.msra.mxu0 %v1767
    %1898 = vmatprep.subr.mxu0 %v1770
    %1899 = vmatpush1.msra.mxu0 %v1769
    %1900 = vmatprep.subr.mxu0 %v1772
    %1901 = vmatpush1.msra.mxu0 %v1771
    %1902 = vmatprep.subr.mxu0 %v1774
    %1903 = vmatpush1.msra.mxu0 %v1773
    %1904 = vmatprep.subr.mxu0 %v1776
    %1905 = vmatpush1.msra.mxu0 %v1775
    %1906 = vmatprep.mubr.f32.mxu0 %v1839
    %1907 = vmatmul.mubr.f32.gmra.mrb[0].mxu0 %v1825
    %v1908 = vpop.f32.mrb[0].mxu0
    %v1909 = vadd.f32 %v1782, %v1908
    %v1910 = vpop.f32.mrb[0].mxu0
    %v1911 = vadd.f32 %v1786, %v1910
    %1912 = vdwg.mxu0
    %v1913 = vmax.f32 %v1909, 0.0
    %v1914 = vmax.f32 %v1911, 0.0
    %1915 = vst [vmem:[#allocation8] sm:$0xff] %v1913
    %1916 = vst [vmem:[#allocation8 + $0x8] sm:$0xff] %v1914
    // Predicated region
    $region34: #{tpu_custom_call.1} parent=1 // pred_check
      _
    $region35: #{tpu_custom_call.1} parent=1 // pred_check_branch
      %1918 = sbr.rel (0) target = $region37
    $region36: #{tpu_custom_call.1} parent=1 // pred_region
      %s1920 = ssub.s32 256, 256
      %1921 = vsyncadd [#allocation4], %s1920
      %s1923 = sshll.u32 [#allocation8], 4
      %s1924 = int_to_ptr.vmem [resolvable:$true] %s1923
      %1926 = dma.vmem_to_hbm [thread:$0]  %s1924, 256, %s5, [#allocation4]
    $region37: #{tpu_custom_call.1} parent=1 // pred_fallthru
      _
    // Predicated region
    $region38: #{tpu_custom_call.1} parent=1 // pred_check
      _
    $region39: #{tpu_custom_call.1} parent=1 // pred_check_branch
      %1928 = sbr.rel (0) target = $region41
    $region40: #{tpu_custom_call.1} parent=1 // pred_region
      %1929 = dma.done [#allocation4], 256
    $region41: #{tpu_custom_call.1} parent=1 // pred_fallthru
      _
    %1930 = vsyncpa [#allocation3], 1
    %1931 = vsyncpa [#allocation6], 1
    %1932 = vsyncpa [#allocation4], 1

</llo_original>
